<compile_context>
chip_gen: v6e
topology: v6e:2x2x1
jax: 0.10.0
libtpu: 0.0.40
codegen_flags: <defaults>
</compile_context>

<pallas_src>
import functools

import jax
import jax.numpy as jnp
from jax.experimental import pallas as pl
from jax.experimental.pallas import tpu as pltpu


# ----------------------------------------------------------------------------
# Kernel: grid = (B, N // block_q).  One batch element's tokens stay resident
# in VMEM; the q-tile axis is "arbitrary" because k/v scratch is filled at
# tile 0 and reused by the remaining tiles of the same batch element.
# ----------------------------------------------------------------------------
def _sr_attention_kernel(
    x_ref,        # (1, N, C)        full token block for this batch element
    wq_ref,       # (C, C)
    wkv_ref,      # (C, 2C)
    wsr_ref,      # (sr*sr*C, C)     SR-conv weight, rows ordered (di, dj, c_in)
    bsr_ref,      # (1, C)
    gamma_ref,    # (1, C)
    beta_ref,     # (1, C)
    wproj_ref,    # (C, C)
    bproj_ref,    # (1, C)
    o_ref,        # (1, block_q, C)
    k_scr,        # (NKP, C) f32 scratch (keys, zero-padded to NKP rows)
    v_scr,        # (NKP, C) f32 scratch (values, zero-padded)
    *,
    num_heads: int,
    scale: float,
    eps: float,
    H: int,
    W: int,
    sr: int,
    block_q: int,
    n_sr: int,
    nkp: int,
):
    i = pl.program_id(1)
    C = wq_ref.shape[0]
    hd = C // num_heads
    Hs, Ws = H // sr, W // sr

    # ---- once per batch element: SR conv + LayerNorm + KV projection --------
    @pl.when(i == 0)
    def _compute_kv():
        xv = x_ref[0]                                   # (N, C) f32, N = H*W
        x5 = xv.reshape(Hs, sr, Ws, sr, C)
        # Conv2d(kernel=stride=sr) == sum over the sr*sr in-patch offsets of
        # (strided patch) @ (C, C) weight block.  bf16 MXU inputs, f32 accum.
        xs = jnp.zeros((n_sr, C), jnp.float32) + bsr_ref[...]
        for di in range(sr):
            for dj in range(sr):
                patch = jax.lax.slice(
                    x5, (0, di, 0, dj, 0), (Hs, di + 1, Ws, dj + 1, C)
                ).reshape(n_sr, C)
                w_blk = wsr_ref[(di * sr + dj) * C:(di * sr + dj + 1) * C, :]
                xs = xs + jnp.dot(
                    patch.astype(jnp.bfloat16),
                    w_blk.astype(jnp.bfloat16),
                    preferred_element_type=jnp.float32,
                )
        # LayerNorm over channels, one-pass variance, f32 math.
        mu = jnp.mean(xs, axis=-1, keepdims=True)
        var = jnp.mean(xs * xs, axis=-1, keepdims=True) - mu * mu
        xn = (xs - mu) * jax.lax.rsqrt(jnp.maximum(var, 0.0) + eps)
        xn = xn * gamma_ref[...] + beta_ref[...]
        # KV projection (qkv_bias=False).
        kv = jnp.dot(
            xn.astype(jnp.bfloat16),
            wkv_ref[...].astype(jnp.bfloat16),
            preferred_element_type=jnp.float32,
        )                                               # (n_sr, 2C)
        k_scr[...] = jnp.zeros_like(k_scr)
        v_scr[...] = jnp.zeros_like(v_scr)
        k_scr[0:n_sr, :] = kv[:, :C]
        v_scr[0:n_sr, :] = kv[:, C:]

    # ---- every q-tile: Q projection + attention fused with output proj ------
    row0 = pl.multiple_of(i * block_q, block_q)
    xq = x_ref[0, pl.ds(row0, block_q), :]              # (tq, C) f32
    q = jnp.dot(
        xq.astype(jnp.bfloat16),
        wq_ref[...].astype(jnp.bfloat16),
        preferred_element_type=jnp.float32,
    ) * scale                                           # scale folded once into q
    qb = q.astype(jnp.bfloat16)

    kb = k_scr[...].astype(jnp.bfloat16)                # (NKP, C)
    vb = v_scr[...].astype(jnp.bfloat16)                # (NKP, C)
    wpb = wproj_ref[...].astype(jnp.bfloat16)           # (C, C)

    # mask for the zero-padded key rows (softmax axis padded to NKP lanes)
    if nkp != n_sr:
        col = jax.lax.broadcasted_iota(jnp.int32, (1, nkp), 1)
        key_mask = jnp.where(col < n_sr, 0.0, -1e30).astype(jnp.float32)
    else:
        key_mask = None

    nt_dims = (((1,), (1,)), ((), ()))                  # contract last dims (q . k)
    acc = jnp.zeros((block_q, C), jnp.float32) + bproj_ref[...]   # start from bias
    for h in range(num_heads):
        qh = qb[:, h * hd:(h + 1) * hd]                 # (tq, hd)
        kh = kb[:, h * hd:(h + 1) * hd]                 # (NKP, hd)
        vh = vb[:, h * hd:(h + 1) * hd]                 # (NKP, hd)
        logits = jax.lax.dot_general(
            qh, kh, nt_dims, preferred_element_type=jnp.float32
        )                                               # (tq, NKP) f32
        if key_mask is not None:
            logits = logits + key_mask
        logits = logits - jnp.max(logits, axis=-1, keepdims=True)
        p = jnp.exp(logits)
        p = p * pl.reciprocal(jnp.sum(p, axis=-1, keepdims=True), approx=True)
        oh = jnp.dot(
            p.astype(jnp.bfloat16), vh, preferred_element_type=jnp.float32
        )                                               # (tq, hd), contraction = NKP
        # fuse output projection: accumulate through this head's wproj slice
        acc = acc + jnp.dot(
            oh.astype(jnp.bfloat16),
            wpb[h * hd:(h + 1) * hd, :],
            preferred_element_type=jnp.float32,
        )
    o_ref[0] = acc.astype(o_ref.dtype)


# ----------------------------------------------------------------------------
# Wrapper
# ----------------------------------------------------------------------------
def sr_attention(x, params, H, W, *, num_heads, sr_ratio, block_q=128):
    B, N, C = x.shape
    assert N == H * W and C % num_heads == 0
    assert sr_ratio > 1 and H % sr_ratio == 0 and W % sr_ratio == 0
    hd = C // num_heads
    scale = hd ** -0.5
    Hs, Ws = H // sr_ratio, W // sr_ratio
    n_sr = Hs * Ws
    nkp = max(128, ((n_sr + 127) // 128) * 128)         # padded key axis (lane dense)
    K_sr = sr_ratio * sr_ratio * C

    tq = min(block_q, N)
    assert N % tq == 0 and tq % 8 == 0 and tq % sr_ratio == 0
    n_q_tiles = N // tq

    kernel = functools.partial(
        _sr_attention_kernel,
        num_heads=num_heads, scale=scale, eps=1e-5,
        H=H, W=W, sr=sr_ratio, block_q=tq, n_sr=n_sr, nkp=nkp,
    )

    full = lambda b, i: (0, 0)   # weights: same block every grid step

    # VMEM budget: double-buffered blocks + weights + scratch + live intermediates.
    est = (
        2 * N * C * 4                                    # x block
        + 2 * tq * C * 4                                 # out block
        + 2 * (C * C + 2 * C * C + K_sr * C + 4 * C) * 4  # weights / biases
        + 2 * nkp * C * 4                                # k/v scratch
        + (tq * nkp + n_sr * 2 * C + tq * C) * 16        # intermediates + headroom
    )
    vmem_limit = int(max(32 * 1024 * 1024, min(56 * 1024 * 1024, 2 * est)))

    return pl.pallas_call(
        kernel,
        out_shape=jax.ShapeDtypeStruct((B, N, C), x.dtype),
        grid_spec=pltpu.PrefetchScalarGridSpec(
            num_scalar_prefetch=0,
            grid=(B, n_q_tiles),
            in_specs=[
                # full token block per batch; block index depends only on b, so
                # it is re-fetched from HBM only when the batch index changes.
                pl.BlockSpec((1, N, C), lambda b, i: (b, 0, 0)),
                pl.BlockSpec((C, C), full),              # wq
                pl.BlockSpec((C, 2 * C), full),          # wkv
                pl.BlockSpec((K_sr, C), full),           # wsr
                pl.BlockSpec((1, C), full),              # bsr
                pl.BlockSpec((1, C), full),              # gamma
                pl.BlockSpec((1, C), full),              # beta
                pl.BlockSpec((C, C), full),              # wproj
                pl.BlockSpec((1, C), full),              # bproj
            ],
            out_specs=pl.BlockSpec((1, tq, C), lambda b, i: (b, i, 0)),
            scratch_shapes=[
                pltpu.VMEM((nkp, C), jnp.float32),       # padded keys
                pltpu.VMEM((nkp, C), jnp.float32),       # padded values
            ],
        ),
        compiler_params=pltpu.CompilerParams(
            dimension_semantics=("parallel", "arbitrary"),
            vmem_limit_bytes=vmem_limit,
        ),
    )(
        x,
        params["wq"], params["wkv"], params["wsr"], params["bsr"],
        params["gamma"], params["beta"], params["wproj"], params["bproj"],
    )


# ----------------------------------------------------------------------------
# Pure-JAX reference (mirrors the PyTorch forward, sr_ratio > 1, linear=False).
# ----------------------------------------------------------------------------
def sr_attention_ref(x, params, H, W, *, num_heads, sr_ratio):
    B, N, C = x.shape
    hd = C // num_heads
    scale = hd ** -0.5
    q = (x @ params["wq"]).reshape(B, N, num_heads, hd).transpose(0, 2, 1, 3)

    Hs, Ws = H // sr_ratio, W // sr_ratio
    xh = x.reshape(B, H, W, C)
    x_sr = (
        xh.reshape(B, Hs, sr_ratio, Ws, sr_ratio, C)
        .transpose(0, 1, 3, 2, 4, 5)
        .reshape(B, Hs * Ws, -1)
    )
    xs = x_sr @ params["wsr"] + params["bsr"]
    mu = xs.mean(-1, keepdims=True)
    var = ((xs - mu) ** 2).mean(-1, keepdims=True)
    xs = (xs - mu) / jnp.sqrt(var + 1e-5) * params["gamma"] + params["beta"]

    kv = (xs @ params["wkv"]).reshape(B, -1, 2, num_heads, hd).transpose(2, 0, 3, 1, 4)
    k, v = kv[0], kv[1]
    attn = jnp.einsum("bhqd,bhkd->bhqk", q, k) * scale
    attn = jax.nn.softmax(attn, axis=-1)
    out = jnp.einsum("bhqk,bhkd->bhqd", attn, v).transpose(0, 2, 1, 3).reshape(B, N, C)
    return out @ params["wproj"] + params["bproj"]


# ----------------------------------------------------------------------------
if __name__ == "__main__":
    B, C, H, W = 2, 32, 8, 8
    num_heads, sr_ratio = 4, 2
    N = H * W
    K_sr = sr_ratio * sr_ratio * C

    key = jax.random.PRNGKey(0)
    ks = jax.random.split(key, 8)
    params = {
        "wq":    0.02 * jax.random.normal(ks[0], (C, C), jnp.float32),
        "wkv":   0.02 * jax.random.normal(ks[1], (C, 2 * C), jnp.float32),
        "wsr":   0.02 * jax.random.normal(ks[2], (K_sr, C), jnp.float32),
        "bsr":   0.01 * jax.random.normal(ks[3], (1, C), jnp.float32),
        "gamma": jnp.ones((1, C), jnp.float32),
        "beta":  jnp.zeros((1, C), jnp.float32),
        "wproj": 0.02 * jax.random.normal(ks[4], (C, C), jnp.float32),
        "bproj": 0.01 * jax.random.normal(ks[5], (1, C), jnp.float32),
    }
    x = jax.random.normal(ks[6], (B, N, C), jnp.float32)

    # block_q=32 -> 2 q-tiles per batch: exercises the tile-0 KV scratch path.
    out = sr_attention(
        x, params, H, W, num_heads=num_heads, sr_ratio=sr_ratio, block_q=32
    )
    out = jax.block_until_ready(out)

    ref = sr_attention_ref(x, params, H, W, num_heads=num_heads, sr_ratio=sr_ratio)
    assert out.shape == (B, N, C)
    assert jnp.allclose(out, ref, atol=2e-2, rtol=2e-2), "mismatch vs JAX reference"

    print("KERNEL_OK")
</pallas_src>

<mosaic_0001>
module attributes {stable_mosaic.version = 11 : i64} {
  func.func @_sr_attention_kernel(%arg0: i32, %arg1: i32, %arg2: memref<1x64x32xf32, #tpu.memory_space<vmem>>, %arg3: memref<32x32xf32, #tpu.memory_space<vmem>>, %arg4: memref<32x64xf32, #tpu.memory_space<vmem>>, %arg5: memref<128x32xf32, #tpu.memory_space<vmem>>, %arg6: memref<1x32xf32, #tpu.memory_space<vmem>>, %arg7: memref<1x32xf32, #tpu.memory_space<vmem>>, %arg8: memref<1x32xf32, #tpu.memory_space<vmem>>, %arg9: memref<32x32xf32, #tpu.memory_space<vmem>>, %arg10: memref<1x32xf32, #tpu.memory_space<vmem>>, %arg11: memref<1x32x32xf32, #tpu.memory_space<vmem>>, %arg12: memref<128x32xf32, #tpu.memory_space<vmem>>, %arg13: memref<128x32xf32, #tpu.memory_space<vmem>>) attributes {dimension_semantics = [#tpu.dimension_semantics<parallel>, #tpu.dimension_semantics<arbitrary>], iteration_bounds = array<i64: 2, 2>, scalar_prefetch = 0 : i64, scratch_operands = 2 : i64, tpu.core_type = #tpu.core_type<tc>, window_params = [{transform_indices = @transform_0, window_bounds = array<i64: 1, 64, 32>}, {pipeline_mode = #tpu.pipeline_mode<synchronous>, transform_indices = @transform_1, window_bounds = array<i64: 32, 32>}, {pipeline_mode = #tpu.pipeline_mode<synchronous>, transform_indices = @transform_2, window_bounds = array<i64: 32, 64>}, {pipeline_mode = #tpu.pipeline_mode<synchronous>, transform_indices = @transform_3, window_bounds = array<i64: 128, 32>}, {pipeline_mode = #tpu.pipeline_mode<synchronous>, transform_indices = @transform_4, window_bounds = array<i64: 1, 32>}, {pipeline_mode = #tpu.pipeline_mode<synchronous>, transform_indices = @transform_5, window_bounds = array<i64: 1, 32>}, {pipeline_mode = #tpu.pipeline_mode<synchronous>, transform_indices = @transform_6, window_bounds = array<i64: 1, 32>}, {pipeline_mode = #tpu.pipeline_mode<synchronous>, transform_indices = @transform_7, window_bounds = array<i64: 32, 32>}, {pipeline_mode = #tpu.pipeline_mode<synchronous>, transform_indices = @transform_8, window_bounds = array<i64: 1, 32>}, {transform_indices = @transform_9, window_bounds = array<i64: 1, 32, 32>}]} {
    %c0_i32 = arith.constant 0 : i32
    %0 = arith.cmpi eq, %arg1, %c0_i32 : i32
    %1 = arith.extui %0 : i1 to i32
    %c0_i32_0 = arith.constant 0 : i32
    %2 = arith.cmpi ne, %1, %c0_i32_0 : i32
    scf.if %2 {
      %c0_39 = arith.constant 0 : index
      %c0_40 = arith.constant 0 : index
      %c0_41 = arith.constant 0 : index
      %122 = vector.load %arg2[%c0_39, %c0_40, %c0_41] : memref<1x64x32xf32, #tpu.memory_space<vmem>>, vector<1x64x32xf32>
      %123 = vector.shape_cast %122 : vector<1x64x32xf32> to vector<64x32xf32>
      %124 = vector.shape_cast %123 : vector<64x32xf32> to vector<4x2x4x2x32xf32>
      %cst_42 = arith.constant 0.000000e+00 : f32
      %125 = vector.broadcast %cst_42 : f32 to vector<16x32xf32>
      %c0_43 = arith.constant 0 : index
      %c0_44 = arith.constant 0 : index
      %126 = vector.load %arg6[%c0_43, %c0_44] : memref<1x32xf32, #tpu.memory_space<vmem>>, vector<1x32xf32>
      %127 = vector.broadcast %126 : vector<1x32xf32> to vector<16x32xf32>
      %128 = arith.addf %125, %127 : vector<16x32xf32>
      %129 = vector.extract_strided_slice %124 {offsets = [0, 0, 0, 0, 0], sizes = [4, 1, 4, 1, 32], strides = [1, 1, 1, 1, 1]} : vector<4x2x4x2x32xf32> to vector<4x1x4x1x32xf32>
      %130 = vector.shape_cast %129 : vector<4x1x4x1x32xf32> to vector<16x32xf32>
      %c0_45 = arith.constant 0 : index
      %c0_46 = arith.constant 0 : index
      %131 = vector.load %arg5[%c0_45, %c0_46] : memref<128x32xf32, #tpu.memory_space<vmem>>, vector<32x32xf32>
      %132 = arith.truncf %130 : vector<16x32xf32> to vector<16x32xbf16>
      %133 = arith.truncf %131 : vector<32x32xf32> to vector<32x32xbf16>
      %cst_47 = arith.constant dense<0.000000e+00> : vector<16x32xf32>
      %134 = tpu.matmul %132, %133, %cst_47 {dimension_numbers = #tpu.dot_dimension_numbers<[1], [0], [0], [1], [0, 0, 1, 1], [], []>} : vector<16x32xbf16>, vector<32x32xbf16>, vector<16x32xf32> -> vector<16x32xf32>
      %135 = arith.addf %128, %134 : vector<16x32xf32>
      %136 = vector.extract_strided_slice %124 {offsets = [0, 0, 0, 1, 0], sizes = [4, 1, 4, 1, 32], strides = [1, 1, 1, 1, 1]} : vector<4x2x4x2x32xf32> to vector<4x1x4x1x32xf32>
      %137 = vector.shape_cast %136 : vector<4x1x4x1x32xf32> to vector<16x32xf32>
      %c32 = arith.constant 32 : index
      %c0_48 = arith.constant 0 : index
      %138 = vector.load %arg5[%c32, %c0_48] : memref<128x32xf32, #tpu.memory_space<vmem>>, vector<32x32xf32>
      %139 = arith.truncf %137 : vector<16x32xf32> to vector<16x32xbf16>
      %140 = arith.truncf %138 : vector<32x32xf32> to vector<32x32xbf16>
      %cst_49 = arith.constant dense<0.000000e+00> : vector<16x32xf32>
      %141 = tpu.matmul %139, %140, %cst_49 {dimension_numbers = #tpu.dot_dimension_numbers<[1], [0], [0], [1], [0, 0, 1, 1], [], []>} : vector<16x32xbf16>, vector<32x32xbf16>, vector<16x32xf32> -> vector<16x32xf32>
      %142 = arith.addf %135, %141 : vector<16x32xf32>
      %143 = vector.extract_strided_slice %124 {offsets = [0, 1, 0, 0, 0], sizes = [4, 1, 4, 1, 32], strides = [1, 1, 1, 1, 1]} : vector<4x2x4x2x32xf32> to vector<4x1x4x1x32xf32>
      %144 = vector.shape_cast %143 : vector<4x1x4x1x32xf32> to vector<16x32xf32>
      %c64 = arith.constant 64 : index
      %c0_50 = arith.constant 0 : index
      %145 = vector.load %arg5[%c64, %c0_50] : memref<128x32xf32, #tpu.memory_space<vmem>>, vector<32x32xf32>
      %146 = arith.truncf %144 : vector<16x32xf32> to vector<16x32xbf16>
      %147 = arith.truncf %145 : vector<32x32xf32> to vector<32x32xbf16>
      %cst_51 = arith.constant dense<0.000000e+00> : vector<16x32xf32>
      %148 = tpu.matmul %146, %147, %cst_51 {dimension_numbers = #tpu.dot_dimension_numbers<[1], [0], [0], [1], [0, 0, 1, 1], [], []>} : vector<16x32xbf16>, vector<32x32xbf16>, vector<16x32xf32> -> vector<16x32xf32>
      %149 = arith.addf %142, %148 : vector<16x32xf32>
      %150 = vector.extract_strided_slice %124 {offsets = [0, 1, 0, 1, 0], sizes = [4, 1, 4, 1, 32], strides = [1, 1, 1, 1, 1]} : vector<4x2x4x2x32xf32> to vector<4x1x4x1x32xf32>
      %151 = vector.shape_cast %150 : vector<4x1x4x1x32xf32> to vector<16x32xf32>
      %c96 = arith.constant 96 : index
      %c0_52 = arith.constant 0 : index
      %152 = vector.load %arg5[%c96, %c0_52] : memref<128x32xf32, #tpu.memory_space<vmem>>, vector<32x32xf32>
      %153 = arith.truncf %151 : vector<16x32xf32> to vector<16x32xbf16>
      %154 = arith.truncf %152 : vector<32x32xf32> to vector<32x32xbf16>
      %cst_53 = arith.constant dense<0.000000e+00> : vector<16x32xf32>
      %155 = tpu.matmul %153, %154, %cst_53 {dimension_numbers = #tpu.dot_dimension_numbers<[1], [0], [0], [1], [0, 0, 1, 1], [], []>} : vector<16x32xbf16>, vector<32x32xbf16>, vector<16x32xf32> -> vector<16x32xf32>
      %156 = arith.addf %149, %155 : vector<16x32xf32>
      %cst_54 = arith.constant dense<0.000000e+00> : vector<16xf32>
      %157 = vector.multi_reduction <add>, %156, %cst_54 [1] : vector<16x32xf32> to vector<16xf32>
      %158 = vector.shape_cast %157 : vector<16xf32> to vector<16x1xf32>
      %cst_55 = arith.constant 3.200000e+01 : f32
      %159 = vector.broadcast %cst_55 : f32 to vector<16x1xf32>
      %160 = arith.divf %158, %159 : vector<16x1xf32>
      %161 = arith.mulf %156, %156 : vector<16x32xf32>
      %cst_56 = arith.constant dense<0.000000e+00> : vector<16xf32>
      %162 = vector.multi_reduction <add>, %161, %cst_56 [1] : vector<16x32xf32> to vector<16xf32>
      %163 = vector.shape_cast %162 : vector<16xf32> to vector<16x1xf32>
      %cst_57 = arith.constant 3.200000e+01 : f32
      %164 = vector.broadcast %cst_57 : f32 to vector<16x1xf32>
      %165 = arith.divf %163, %164 : vector<16x1xf32>
      %166 = arith.mulf %160, %160 : vector<16x1xf32>
      %167 = arith.subf %165, %166 : vector<16x1xf32>
      %168 = vector.broadcast %160 : vector<16x1xf32> to vector<16x32xf32>
      %169 = arith.subf %156, %168 : vector<16x32xf32>
      %cst_58 = arith.constant 0.000000e+00 : f32
      %170 = vector.broadcast %cst_58 : f32 to vector<16x1xf32>
      %171 = arith.maximumf %167, %170 : vector<16x1xf32>
      %cst_59 = arith.constant 9.99999974E-6 : f32
      %172 = vector.broadcast %cst_59 : f32 to vector<16x1xf32>
      %173 = arith.addf %171, %172 : vector<16x1xf32>
      %174 = math.rsqrt %173 : vector<16x1xf32>
      %175 = vector.broadcast %174 : vector<16x1xf32> to vector<16x32xf32>
      %176 = arith.mulf %169, %175 : vector<16x32xf32>
      %c0_60 = arith.constant 0 : index
      %c0_61 = arith.constant 0 : index
      %177 = vector.load %arg7[%c0_60, %c0_61] : memref<1x32xf32, #tpu.memory_space<vmem>>, vector<1x32xf32>
      %178 = vector.broadcast %177 : vector<1x32xf32> to vector<16x32xf32>
      %179 = arith.mulf %176, %178 : vector<16x32xf32>
      %c0_62 = arith.constant 0 : index
      %c0_63 = arith.constant 0 : index
      %180 = vector.load %arg8[%c0_62, %c0_63] : memref<1x32xf32, #tpu.memory_space<vmem>>, vector<1x32xf32>
      %181 = vector.broadcast %180 : vector<1x32xf32> to vector<16x32xf32>
      %182 = arith.addf %179, %181 : vector<16x32xf32>
      %183 = arith.truncf %182 : vector<16x32xf32> to vector<16x32xbf16>
      %c0_64 = arith.constant 0 : index
      %c0_65 = arith.constant 0 : index
      %184 = vector.load %arg4[%c0_64, %c0_65] : memref<32x64xf32, #tpu.memory_space<vmem>>, vector<32x64xf32>
      %185 = arith.truncf %184 : vector<32x64xf32> to vector<32x64xbf16>
      %cst_66 = arith.constant dense<0.000000e+00> : vector<16x64xf32>
      %186 = tpu.matmul %183, %185, %cst_66 {dimension_numbers = #tpu.dot_dimension_numbers<[1], [0], [0], [1], [0, 0, 1, 1], [], []>} : vector<16x32xbf16>, vector<32x64xbf16>, vector<16x64xf32> -> vector<16x64xf32>
      %cst_67 = arith.constant 0.000000e+00 : f32
      %187 = vector.broadcast %cst_67 : f32 to vector<128x32xf32>
      %c0_68 = arith.constant 0 : index
      %c0_69 = arith.constant 0 : index
      %188 = vector.load %arg12[%c0_68, %c0_69] : memref<128x32xf32, #tpu.memory_space<vmem>>, vector<128x32xf32>
      tpu.vector_store %arg12[%c0_68, %c0_69], %187 {strides = array<i32>} : memref<128x32xf32, #tpu.memory_space<vmem>>, vector<128x32xf32>,
      %cst_70 = arith.constant 0.000000e+00 : f32
      %189 = vector.broadcast %cst_70 : f32 to vector<128x32xf32>
      %c0_71 = arith.constant 0 : index
      %c0_72 = arith.constant 0 : index
      %190 = vector.load %arg13[%c0_71, %c0_72] : memref<128x32xf32, #tpu.memory_space<vmem>>, vector<128x32xf32>
      tpu.vector_store %arg13[%c0_71, %c0_72], %189 {strides = array<i32>} : memref<128x32xf32, #tpu.memory_space<vmem>>, vector<128x32xf32>,
      %191 = vector.extract_strided_slice %186 {offsets = [0, 0], sizes = [16, 32], strides = [1, 1]} : vector<16x64xf32> to vector<16x32xf32>
      %c0_73 = arith.constant 0 : index
      %c0_74 = arith.constant 0 : index
      %192 = vector.load %arg12[%c0_73, %c0_74] : memref<128x32xf32, #tpu.memory_space<vmem>>, vector<16x32xf32>
      tpu.vector_store %arg12[%c0_73, %c0_74], %191 {strides = array<i32>} : memref<128x32xf32, #tpu.memory_space<vmem>>, vector<16x32xf32>,
      %193 = vector.extract_strided_slice %186 {offsets = [0, 32], sizes = [16, 32], strides = [1, 1]} : vector<16x64xf32> to vector<16x32xf32>
      %c0_75 = arith.constant 0 : index
      %c0_76 = arith.constant 0 : index
      %194 = vector.load %arg13[%c0_75, %c0_76] : memref<128x32xf32, #tpu.memory_space<vmem>>, vector<16x32xf32>
      tpu.vector_store %arg13[%c0_75, %c0_76], %193 {strides = array<i32>} : memref<128x32xf32, #tpu.memory_space<vmem>>, vector<16x32xf32>,
    } else {
    }
    %c32_i32 = arith.constant 32 : i32
    %3 = arith.muli %arg1, %c32_i32 : i32
    %4 = tpu.assume_multiple %3, 32 : i32
    %c0 = arith.constant 0 : index
    %5 = arith.index_cast %4 : i32 to index
    %c0_1 = arith.constant 0 : index
    %6 = vector.load %arg2[%c0, %5, %c0_1] : memref<1x64x32xf32, #tpu.memory_space<vmem>>, vector<1x32x32xf32>
    %7 = vector.shape_cast %6 : vector<1x32x32xf32> to vector<32x32xf32>
    %8 = arith.truncf %7 : vector<32x32xf32> to vector<32x32xbf16>
    %c0_2 = arith.constant 0 : index
    %c0_3 = arith.constant 0 : index
    %9 = vector.load %arg3[%c0_2, %c0_3] : memref<32x32xf32, #tpu.memory_space<vmem>>, vector<32x32xf32>
    %10 = arith.truncf %9 : vector<32x32xf32> to vector<32x32xbf16>
    %cst = arith.constant dense<0.000000e+00> : vector<32x32xf32>
    %11 = tpu.matmul %8, %10, %cst {dimension_numbers = #tpu.dot_dimension_numbers<[1], [0], [0], [1], [0, 0, 1, 1], [], []>} : vector<32x32xbf16>, vector<32x32xbf16>, vector<32x32xf32> -> vector<32x32xf32>
    %cst_4 = arith.constant 0.353553385 : f32
    %12 = vector.broadcast %cst_4 : f32 to vector<32x32xf32>
    %13 = arith.mulf %11, %12 : vector<32x32xf32>
    %14 = arith.truncf %13 : vector<32x32xf32> to vector<32x32xbf16>
    %c0_5 = arith.constant 0 : index
    %c0_6 = arith.constant 0 : index
    %15 = vector.load %arg12[%c0_5, %c0_6] : memref<128x32xf32, #tpu.memory_space<vmem>>, vector<128x32xf32>
    %16 = arith.truncf %15 : vector<128x32xf32> to vector<128x32xbf16>
    %c0_7 = arith.constant 0 : index
    %c0_8 = arith.constant 0 : index
    %17 = vector.load %arg13[%c0_7, %c0_8] : memref<128x32xf32, #tpu.memory_space<vmem>>, vector<128x32xf32>
    %18 = arith.truncf %17 : vector<128x32xf32> to vector<128x32xbf16>
    %c0_9 = arith.constant 0 : index
    %c0_10 = arith.constant 0 : index
    %19 = vector.load %arg9[%c0_9, %c0_10] : memref<32x32xf32, #tpu.memory_space<vmem>>, vector<32x32xf32>
    %20 = arith.truncf %19 : vector<32x32xf32> to vector<32x32xbf16>
    %21 = tpu.iota {dimensions = array<i32: 1>} : vector<1x128xi32>
    %c16_i32 = arith.constant 16 : i32
    %22 = vector.broadcast %c16_i32 : i32 to vector<1x128xi32>
    %23 = arith.cmpi slt, %21, %22 : vector<1x128xi32>
    %cst_11 = arith.constant 0.000000e+00 : f32
    %cst_12 = arith.constant -1.000000e+30 : f32
    %24 = vector.broadcast %cst_11 : f32 to vector<1x128xf32>
    %25 = vector.broadcast %cst_12 : f32 to vector<1x128xf32>
    %26 = arith.select %23, %24, %25 : vector<1x128xi1>, vector<1x128xf32>
    %cst_13 = arith.constant 0.000000e+00 : f32
    %27 = vector.broadcast %cst_13 : f32 to vector<32x32xf32>
    %c0_14 = arith.constant 0 : index
    %c0_15 = arith.constant 0 : index
    %28 = vector.load %arg10[%c0_14, %c0_15] : memref<1x32xf32, #tpu.memory_space<vmem>>, vector<1x32xf32>
    %29 = vector.broadcast %28 : vector<1x32xf32> to vector<32x32xf32>
    %30 = arith.addf %27, %29 : vector<32x32xf32>
    %31 = vector.extract_strided_slice %14 {offsets = [0, 0], sizes = [32, 8], strides = [1, 1]} : vector<32x32xbf16> to vector<32x8xbf16>
    %32 = vector.extract_strided_slice %16 {offsets = [0, 0], sizes = [128, 8], strides = [1, 1]} : vector<128x32xbf16> to vector<128x8xbf16>
    %33 = vector.extract_strided_slice %18 {offsets = [0, 0], sizes = [128, 8], strides = [1, 1]} : vector<128x32xbf16> to vector<128x8xbf16>
    %cst_16 = arith.constant dense<0.000000e+00> : vector<32x128xf32>
    %34 = tpu.matmul %31, %32, %cst_16 {dimension_numbers = #tpu.dot_dimension_numbers<[1], [1], [0], [0], [0, 0, 1, 0], [], []>} : vector<32x8xbf16>, vector<128x8xbf16>, vector<32x128xf32> -> vector<32x128xf32>
    %35 = vector.broadcast %26 : vector<1x128xf32> to vector<32x128xf32>
    %36 = arith.addf %34, %35 : vector<32x128xf32>
    %cst_17 = arith.constant dense<0xFF800000> : vector<32xf32>
    %37 = vector.multi_reduction <maximumf>, %36, %cst_17 [1] : vector<32x128xf32> to vector<32xf32>
    %38 = vector.shape_cast %37 : vector<32xf32> to vector<32x1xf32>
    %39 = vector.broadcast %38 : vector<32x1xf32> to vector<32x128xf32>
    %40 = arith.subf %36, %39 : vector<32x128xf32>
    %41 = math.exp %40 : vector<32x128xf32>
    %cst_18 = arith.constant dense<0.000000e+00> : vector<32xf32>
    %42 = vector.multi_reduction <add>, %41, %cst_18 [1] : vector<32x128xf32> to vector<32xf32>
    %43 = vector.shape_cast %42 : vector<32xf32> to vector<32x1xf32>
    %44 = tpu.reciprocal %43 {approx = true} : vector<32x1xf32> -> vector<32x1xf32>
    %45 = vector.broadcast %44 : vector<32x1xf32> to vector<32x128xf32>
    %46 = arith.mulf %41, %45 : vector<32x128xf32>
    %47 = arith.truncf %46 : vector<32x128xf32> to vector<32x128xbf16>
    %cst_19 = arith.constant dense<0.000000e+00> : vector<32x8xf32>
    %48 = tpu.matmul %47, %33, %cst_19 {dimension_numbers = #tpu.dot_dimension_numbers<[1], [0], [0], [1], [0, 0, 1, 1], [], []>} : vector<32x128xbf16>, vector<128x8xbf16>, vector<32x8xf32> -> vector<32x8xf32>
    %49 = arith.truncf %48 : vector<32x8xf32> to vector<32x8xbf16>
    %50 = vector.extract_strided_slice %20 {offsets = [0, 0], sizes = [8, 32], strides = [1, 1]} : vector<32x32xbf16> to vector<8x32xbf16>
    %cst_20 = arith.constant dense<0.000000e+00> : vector<32x32xf32>
    %51 = tpu.matmul %49, %50, %cst_20 {dimension_numbers = #tpu.dot_dimension_numbers<[1], [0], [0], [1], [0, 0, 1, 1], [], []>} : vector<32x8xbf16>, vector<8x32xbf16>, vector<32x32xf32> -> vector<32x32xf32>
    %52 = arith.addf %30, %51 : vector<32x32xf32>
    %53 = vector.extract_strided_slice %14 {offsets = [0, 8], sizes = [32, 8], strides = [1, 1]} : vector<32x32xbf16> to vector<32x8xbf16>
    %54 = vector.extract_strided_slice %16 {offsets = [0, 8], sizes = [128, 8], strides = [1, 1]} : vector<128x32xbf16> to vector<128x8xbf16>
    %55 = vector.extract_strided_slice %18 {offsets = [0, 8], sizes = [128, 8], strides = [1, 1]} : vector<128x32xbf16> to vector<128x8xbf16>
    %cst_21 = arith.constant dense<0.000000e+00> : vector<32x128xf32>
    %56 = tpu.matmul %53, %54, %cst_21 {dimension_numbers = #tpu.dot_dimension_numbers<[1], [1], [0], [0], [0, 0, 1, 0], [], []>} : vector<32x8xbf16>, vector<128x8xbf16>, vector<32x128xf32> -> vector<32x128xf32>
    %57 = vector.broadcast %26 : vector<1x128xf32> to vector<32x128xf32>
    %58 = arith.addf %56, %57 : vector<32x128xf32>
    %cst_22 = arith.constant dense<0xFF800000> : vector<32xf32>
    %59 = vector.multi_reduction <maximumf>, %58, %cst_22 [1] : vector<32x128xf32> to vector<32xf32>
    %60 = vector.shape_cast %59 : vector<32xf32> to vector<32x1xf32>
    %61 = vector.broadcast %60 : vector<32x1xf32> to vector<32x128xf32>
    %62 = arith.subf %58, %61 : vector<32x128xf32>
    %63 = math.exp %62 : vector<32x128xf32>
    %cst_23 = arith.constant dense<0.000000e+00> : vector<32xf32>
    %64 = vector.multi_reduction <add>, %63, %cst_23 [1] : vector<32x128xf32> to vector<32xf32>
    %65 = vector.shape_cast %64 : vector<32xf32> to vector<32x1xf32>
    %66 = tpu.reciprocal %65 {approx = true} : vector<32x1xf32> -> vector<32x1xf32>
    %67 = vector.broadcast %66 : vector<32x1xf32> to vector<32x128xf32>
    %68 = arith.mulf %63, %67 : vector<32x128xf32>
    %69 = arith.truncf %68 : vector<32x128xf32> to vector<32x128xbf16>
    %cst_24 = arith.constant dense<0.000000e+00> : vector<32x8xf32>
    %70 = tpu.matmul %69, %55, %cst_24 {dimension_numbers = #tpu.dot_dimension_numbers<[1], [0], [0], [1], [0, 0, 1, 1], [], []>} : vector<32x128xbf16>, vector<128x8xbf16>, vector<32x8xf32> -> vector<32x8xf32>
    %71 = arith.truncf %70 : vector<32x8xf32> to vector<32x8xbf16>
    %72 = vector.extract_strided_slice %20 {offsets = [8, 0], sizes = [8, 32], strides = [1, 1]} : vector<32x32xbf16> to vector<8x32xbf16>
    %cst_25 = arith.constant dense<0.000000e+00> : vector<32x32xf32>
    %73 = tpu.matmul %71, %72, %cst_25 {dimension_numbers = #tpu.dot_dimension_numbers<[1], [0], [0], [1], [0, 0, 1, 1], [], []>} : vector<32x8xbf16>, vector<8x32xbf16>, vector<32x32xf32> -> vector<32x32xf32>
    %74 = arith.addf %52, %73 : vector<32x32xf32>
    %75 = vector.extract_strided_slice %14 {offsets = [0, 16], sizes = [32, 8], strides = [1, 1]} : vector<32x32xbf16> to vector<32x8xbf16>
    %76 = vector.extract_strided_slice %16 {offsets = [0, 16], sizes = [128, 8], strides = [1, 1]} : vector<128x32xbf16> to vector<128x8xbf16>
    %77 = vector.extract_strided_slice %18 {offsets = [0, 16], sizes = [128, 8], strides = [1, 1]} : vector<128x32xbf16> to vector<128x8xbf16>
    %cst_26 = arith.constant dense<0.000000e+00> : vector<32x128xf32>
    %78 = tpu.matmul %75, %76, %cst_26 {dimension_numbers = #tpu.dot_dimension_numbers<[1], [1], [0], [0], [0, 0, 1, 0], [], []>} : vector<32x8xbf16>, vector<128x8xbf16>, vector<32x128xf32> -> vector<32x128xf32>
    %79 = vector.broadcast %26 : vector<1x128xf32> to vector<32x128xf32>
    %80 = arith.addf %78, %79 : vector<32x128xf32>
    %cst_27 = arith.constant dense<0xFF800000> : vector<32xf32>
    %81 = vector.multi_reduction <maximumf>, %80, %cst_27 [1] : vector<32x128xf32> to vector<32xf32>
    %82 = vector.shape_cast %81 : vector<32xf32> to vector<32x1xf32>
    %83 = vector.broadcast %82 : vector<32x1xf32> to vector<32x128xf32>
    %84 = arith.subf %80, %83 : vector<32x128xf32>
    %85 = math.exp %84 : vector<32x128xf32>
    %cst_28 = arith.constant dense<0.000000e+00> : vector<32xf32>
    %86 = vector.multi_reduction <add>, %85, %cst_28 [1] : vector<32x128xf32> to vector<32xf32>
    %87 = vector.shape_cast %86 : vector<32xf32> to vector<32x1xf32>
    %88 = tpu.reciprocal %87 {approx = true} : vector<32x1xf32> -> vector<32x1xf32>
    %89 = vector.broadcast %88 : vector<32x1xf32> to vector<32x128xf32>
    %90 = arith.mulf %85, %89 : vector<32x128xf32>
    %91 = arith.truncf %90 : vector<32x128xf32> to vector<32x128xbf16>
    %cst_29 = arith.constant dense<0.000000e+00> : vector<32x8xf32>
    %92 = tpu.matmul %91, %77, %cst_29 {dimension_numbers = #tpu.dot_dimension_numbers<[1], [0], [0], [1], [0, 0, 1, 1], [], []>} : vector<32x128xbf16>, vector<128x8xbf16>, vector<32x8xf32> -> vector<32x8xf32>
    %93 = arith.truncf %92 : vector<32x8xf32> to vector<32x8xbf16>
    %94 = vector.extract_strided_slice %20 {offsets = [16, 0], sizes = [8, 32], strides = [1, 1]} : vector<32x32xbf16> to vector<8x32xbf16>
    %cst_30 = arith.constant dense<0.000000e+00> : vector<32x32xf32>
    %95 = tpu.matmul %93, %94, %cst_30 {dimension_numbers = #tpu.dot_dimension_numbers<[1], [0], [0], [1], [0, 0, 1, 1], [], []>} : vector<32x8xbf16>, vector<8x32xbf16>, vector<32x32xf32> -> vector<32x32xf32>
    %96 = arith.addf %74, %95 : vector<32x32xf32>
    %97 = vector.extract_strided_slice %14 {offsets = [0, 24], sizes = [32, 8], strides = [1, 1]} : vector<32x32xbf16> to vector<32x8xbf16>
    %98 = vector.extract_strided_slice %16 {offsets = [0, 24], sizes = [128, 8], strides = [1, 1]} : vector<128x32xbf16> to vector<128x8xbf16>
    %99 = vector.extract_strided_slice %18 {offsets = [0, 24], sizes = [128, 8], strides = [1, 1]} : vector<128x32xbf16> to vector<128x8xbf16>
    %cst_31 = arith.constant dense<0.000000e+00> : vector<32x128xf32>
    %100 = tpu.matmul %97, %98, %cst_31 {dimension_numbers = #tpu.dot_dimension_numbers<[1], [1], [0], [0], [0, 0, 1, 0], [], []>} : vector<32x8xbf16>, vector<128x8xbf16>, vector<32x128xf32> -> vector<32x128xf32>
    %101 = vector.broadcast %26 : vector<1x128xf32> to vector<32x128xf32>
    %102 = arith.addf %100, %101 : vector<32x128xf32>
    %cst_32 = arith.constant dense<0xFF800000> : vector<32xf32>
    %103 = vector.multi_reduction <maximumf>, %102, %cst_32 [1] : vector<32x128xf32> to vector<32xf32>
    %104 = vector.shape_cast %103 : vector<32xf32> to vector<32x1xf32>
    %105 = vector.broadcast %104 : vector<32x1xf32> to vector<32x128xf32>
    %106 = arith.subf %102, %105 : vector<32x128xf32>
    %107 = math.exp %106 : vector<32x128xf32>
    %cst_33 = arith.constant dense<0.000000e+00> : vector<32xf32>
    %108 = vector.multi_reduction <add>, %107, %cst_33 [1] : vector<32x128xf32> to vector<32xf32>
    %109 = vector.shape_cast %108 : vector<32xf32> to vector<32x1xf32>
    %110 = tpu.reciprocal %109 {approx = true} : vector<32x1xf32> -> vector<32x1xf32>
    %111 = vector.broadcast %110 : vector<32x1xf32> to vector<32x128xf32>
    %112 = arith.mulf %107, %111 : vector<32x128xf32>
    %113 = arith.truncf %112 : vector<32x128xf32> to vector<32x128xbf16>
    %cst_34 = arith.constant dense<0.000000e+00> : vector<32x8xf32>
    %114 = tpu.matmul %113, %99, %cst_34 {dimension_numbers = #tpu.dot_dimension_numbers<[1], [0], [0], [1], [0, 0, 1, 1], [], []>} : vector<32x128xbf16>, vector<128x8xbf16>, vector<32x8xf32> -> vector<32x8xf32>
    %115 = arith.truncf %114 : vector<32x8xf32> to vector<32x8xbf16>
    %116 = vector.extract_strided_slice %20 {offsets = [24, 0], sizes = [8, 32], strides = [1, 1]} : vector<32x32xbf16> to vector<8x32xbf16>
    %cst_35 = arith.constant dense<0.000000e+00> : vector<32x32xf32>
    %117 = tpu.matmul %115, %116, %cst_35 {dimension_numbers = #tpu.dot_dimension_numbers<[1], [0], [0], [1], [0, 0, 1, 1], [], []>} : vector<32x8xbf16>, vector<8x32xbf16>, vector<32x32xf32> -> vector<32x32xf32>
    %118 = arith.addf %96, %117 : vector<32x32xf32>
    %c0_36 = arith.constant 0 : index
    %c0_37 = arith.constant 0 : index
    %c0_38 = arith.constant 0 : index
    %119 = vector.load %arg11[%c0_36, %c0_37, %c0_38] : memref<1x32x32xf32, #tpu.memory_space<vmem>>, vector<1x32x32xf32>
    %120 = vector.shape_cast %119 : vector<1x32x32xf32> to vector<32x32xf32>
    %121 = vector.shape_cast %118 : vector<32x32xf32> to vector<1x32x32xf32>
    tpu.vector_store %arg11[%c0_36, %c0_37, %c0_38], %121 {strides = array<i32>} : memref<1x32x32xf32, #tpu.memory_space<vmem>>, vector<1x32x32xf32>,
    return
  }
  func.func @transform_0(%arg0: i32, %arg1: i32) -> (i32, i32, i32) {
    %c0_i32 = arith.constant 0 : i32
    %c0_i32_0 = arith.constant 0 : i32
    %c0_i32_1 = arith.constant 0 : i32
    return %arg0, %c0_i32, %c0_i32_0 : i32, i32, i32
  }
  func.func @transform_1(%arg0: i32, %arg1: i32) -> (i32, i32) {
    %c0_i32 = arith.constant 0 : i32
    %c0_i32_0 = arith.constant 0 : i32
    %c0_i32_1 = arith.constant 0 : i32
    return %c0_i32, %c0_i32_0 : i32, i32
  }
  func.func @transform_2(%arg0: i32, %arg1: i32) -> (i32, i32) {
    %c0_i32 = arith.constant 0 : i32
    %c0_i32_0 = arith.constant 0 : i32
    %c0_i32_1 = arith.constant 0 : i32
    return %c0_i32, %c0_i32_0 : i32, i32
  }
  func.func @transform_3(%arg0: i32, %arg1: i32) -> (i32, i32) {
    %c0_i32 = arith.constant 0 : i32
    %c0_i32_0 = arith.constant 0 : i32
    %c0_i32_1 = arith.constant 0 : i32
    return %c0_i32, %c0_i32_0 : i32, i32
  }
  func.func @transform_4(%arg0: i32, %arg1: i32) -> (i32, i32) {
    %c0_i32 = arith.constant 0 : i32
    %c0_i32_0 = arith.constant 0 : i32
    %c0_i32_1 = arith.constant 0 : i32
    return %c0_i32, %c0_i32_0 : i32, i32
  }
  func.func @transform_5(%arg0: i32, %arg1: i32) -> (i32, i32) {
    %c0_i32 = arith.constant 0 : i32
    %c0_i32_0 = arith.constant 0 : i32
    %c0_i32_1 = arith.constant 0 : i32
    return %c0_i32, %c0_i32_0 : i32, i32
  }
  func.func @transform_6(%arg0: i32, %arg1: i32) -> (i32, i32) {
    %c0_i32 = arith.constant 0 : i32
    %c0_i32_0 = arith.constant 0 : i32
    %c0_i32_1 = arith.constant 0 : i32
    return %c0_i32, %c0_i32_0 : i32, i32
  }
  func.func @transform_7(%arg0: i32, %arg1: i32) -> (i32, i32) {
    %c0_i32 = arith.constant 0 : i32
    %c0_i32_0 = arith.constant 0 : i32
    %c0_i32_1 = arith.constant 0 : i32
    return %c0_i32, %c0_i32_0 : i32, i32
  }
  func.func @transform_8(%arg0: i32, %arg1: i32) -> (i32, i32) {
    %c0_i32 = arith.constant 0 : i32
    %c0_i32_0 = arith.constant 0 : i32
    %c0_i32_1 = arith.constant 0 : i32
    return %c0_i32, %c0_i32_0 : i32, i32
  }
  func.func @transform_9(%arg0: i32, %arg1: i32) -> (i32, i32, i32) {
    %c0_i32 = arith.constant 0 : i32
    %c0_i32_0 = arith.constant 0 : i32
    return %arg0, %arg1, %c0_i32 : i32, i32, i32
  }
}

</mosaic_0001>

<llo_original>
// kernel: tpu_custom_call.1
$region0: #{tpu_custom_call.1}
  #allocation0 [shape = 'u32[]', space=smem, size = 0x4, offset = 0x4, fixed_abs, tag = 'smem constant byte address 0x4 - core index']
  #allocation1 [shape = 'u32[144,128]{1,0:T(1,128)}', space=vmem, size = 0x12000, scoped, tag = 'internal scratch']
  #allocation2 [shape = 'f32[128,32]{1,0:T(8,128)}', space=vmem, size = 0x10000, scoped, tag = 'scratch operand']
  #allocation3 [shape = 'f32[128,32]{1,0:T(8,128)}', space=vmem, size = 0x10000, scoped, tag = 'scratch operand']
  %s0 = inlined_call_operand.vmem [shape: f32[2,64,32], index: 0, kind: input, shape index: {}]
  %s1 = inlined_call_operand.vmem [shape: f32[32,32], index: 1, kind: input, shape index: {}]
  %s2 = inlined_call_operand.vmem [shape: f32[32,64], index: 2, kind: input, shape index: {}]
  %s3 = inlined_call_operand.vmem [shape: f32[128,32], index: 3, kind: input, shape index: {}]
  %s4 = inlined_call_operand.vmem [shape: f32[1,32], index: 4, kind: input, shape index: {}]
  %s5 = inlined_call_operand.vmem [shape: f32[1,32], index: 5, kind: input, shape index: {}]
  %s6 = inlined_call_operand.vmem [shape: f32[1,32], index: 6, kind: input, shape index: {}]
  %s7 = inlined_call_operand.vmem [shape: f32[32,32], index: 7, kind: input, shape index: {}]
  %s8 = inlined_call_operand.vmem [shape: f32[1,32], index: 8, kind: input, shape index: {}]
  %s9 = inlined_call_operand.vmem [shape: f32[2,64,32], index: 9, kind: output, shape index: {}]
  %s10 = sld [smem:[#allocation0]]
  $region73: #{tpu_custom_call.1} parent=0
    _
  %s12 = ssub.s32 1, %s10
  %s13 = scalar_select 0, %s12, %s10
  loop: start=0, step=1, limit=6
  $region2: #{tpu_custom_call.1} parent=0 // loop_pre_header
    _
  $region3: #{tpu_custom_call.1} parent=0 // loop_header
    %s15 = sphi 0, %s19
    %p16 = scmp.ge.s32.totalorder %s15, 6
    %s22 = sphi 0, %s34
    %s23 = sphi 0, %s30
    %s24 = sphi 0, %s22
    %s25 = sphi 0, %s23
    %s26 = sphi 0, %s24
    %s27 = sphi 0, %s25
    %s37 = sphi 0, %s39
    %s40 = sphi 0, %s37
    %s41 = sphi 0, %s40
    %s57 = sphi 0, %s41
    %s61 = sphi 0, %s61
    %s63 = sphi 0, %s61
    %s64 = sphi 0, %s63
    %s78 = sphi 0, %s64
    %s82 = sphi 0, %s82
    %s84 = sphi 0, %s82
    %s85 = sphi 0, %s84
    %s99 = sphi 0, %s85
    %s103 = sphi 0, %s103
    %s105 = sphi 0, %s103
    %s106 = sphi 0, %s105
    %s120 = sphi 0, %s106
    %s124 = sphi 0, %s124
    %s126 = sphi 0, %s124
    %s127 = sphi 0, %s126
    %s141 = sphi 0, %s127
    %s145 = sphi 0, %s145
    %s147 = sphi 0, %s145
    %s148 = sphi 0, %s147
    %s162 = sphi 0, %s148
    %s166 = sphi 0, %s166
    %s168 = sphi 0, %s166
    %s169 = sphi 0, %s168
    %s183 = sphi 0, %s169
    %s187 = sphi 0, %s187
    %s189 = sphi 0, %s187
    %s190 = sphi 0, %s189
    %s204 = sphi 0, %s190
    %s208 = sphi 0, %s208
    %s210 = sphi 0, %s208
    %s211 = sphi 0, %s210
    %s225 = sphi 0, %s211
    %s233 = sphi 0, %s235
    %s236 = sphi 0, %s233
    %s237 = sphi 0, %s236
    %s253 = sphi 0, %s237
  $region4: #{tpu_custom_call.1} parent=0 // loop_header_branch
    %18 = sbr.rel (%p16) target = $region8
  $region5: #{tpu_custom_call.1} parent=0 // loop_body
    %s20 = ssub.s32 %s15, 1
    %s21 = ssub.s32 %s15, 2
    %s28 = sadd.s32 1, %s23
    %p29 = scmp.ge.s32.totalorder %s28, 2
    %s30 = scalar_select %p29, 0, %s28
    %s31 = sadd.s32 1, %s22
    %s32 = scalar_select %p29, %s31, %s22
    %p33 = scmp.ge.s32.totalorder %s32, 2
    %s34 = scalar_select %p33, 0, %s32
    %s35 = ssub.s32 %s22, %s34
    %p36 = scmp.eq.s32.totalorder %s35, 0
    %s38 = sadd.s32 %s37, 1
    %s39 = scalar_select %p36, %s37, %s38
    %p42 = pneg %p36
    %p43 = scmp.eq.s32.totalorder %s15, 3
    %p44 = por %p42, %p43
    %p45 = scmp.ne.s32.totalorder %s37, %s40
    %p46 = scmp.eq.s32.totalorder %s15, 0
    %p47 = por %p45, %p46
    %p48 = scmp.ne.s32.totalorder %s37, %s40
    %p49 = scmp.eq.s32.totalorder %s20, 3
    %p50 = por %p48, %p49
    %p51 = scmp.ne.s32.totalorder %s40, %s41
    %p52 = scmp.eq.s32.totalorder %s20, 0
    %p53 = por %p51, %p52
    %p54 = scmp.ne.s32.totalorder %s40, %s41
    %p55 = scmp.eq.s32.totalorder %s21, 3
    %p56 = por %p54, %p55
    %p58 = scmp.ne.s32.totalorder %s41, %s57
    %p59 = scmp.eq.s32.totalorder %s21, 0
    %p60 = por %p58, %p59
    %s62 = sadd.s32 %s61, 1
    %p65 = scmp.eq.s32.totalorder %s15, 3
    %p66 = scmp.ne.s32.totalorder %s61, %s63
    %p67 = scmp.eq.s32.totalorder %s15, 0
    %p68 = por %p66, %p67
    %p69 = scmp.ne.s32.totalorder %s61, %s63
    %p70 = scmp.eq.s32.totalorder %s20, 3
    %p71 = por %p69, %p70
    %p72 = scmp.ne.s32.totalorder %s63, %s64
    %p73 = scmp.eq.s32.totalorder %s20, 0
    %p74 = por %p72, %p73
    %p75 = scmp.ne.s32.totalorder %s63, %s64
    %p76 = scmp.eq.s32.totalorder %s21, 3
    %p77 = por %p75, %p76
    %p79 = scmp.ne.s32.totalorder %s64, %s78
    %p80 = scmp.eq.s32.totalorder %s21, 0
    %p81 = por %p79, %p80
    %s83 = sadd.s32 %s82, 1
    %p86 = scmp.eq.s32.totalorder %s15, 3
    %p87 = scmp.ne.s32.totalorder %s82, %s84
    %p88 = scmp.eq.s32.totalorder %s15, 0
    %p89 = por %p87, %p88
    %p90 = scmp.ne.s32.totalorder %s82, %s84
    %p91 = scmp.eq.s32.totalorder %s20, 3
    %p92 = por %p90, %p91
    %p93 = scmp.ne.s32.totalorder %s84, %s85
    %p94 = scmp.eq.s32.totalorder %s20, 0
    %p95 = por %p93, %p94
    %p96 = scmp.ne.s32.totalorder %s84, %s85
    %p97 = scmp.eq.s32.totalorder %s21, 3
    %p98 = por %p96, %p97
    %p100 = scmp.ne.s32.totalorder %s85, %s99
    %p101 = scmp.eq.s32.totalorder %s21, 0
    %p102 = por %p100, %p101
    %s104 = sadd.s32 %s103, 1
    %p107 = scmp.eq.s32.totalorder %s15, 3
    %p108 = scmp.ne.s32.totalorder %s103, %s105
    %p109 = scmp.eq.s32.totalorder %s15, 0
    %p110 = por %p108, %p109
    %p111 = scmp.ne.s32.totalorder %s103, %s105
    %p112 = scmp.eq.s32.totalorder %s20, 3
    %p113 = por %p111, %p112
    %p114 = scmp.ne.s32.totalorder %s105, %s106
    %p115 = scmp.eq.s32.totalorder %s20, 0
    %p116 = por %p114, %p115
    %p117 = scmp.ne.s32.totalorder %s105, %s106
    %p118 = scmp.eq.s32.totalorder %s21, 3
    %p119 = por %p117, %p118
    %p121 = scmp.ne.s32.totalorder %s106, %s120
    %p122 = scmp.eq.s32.totalorder %s21, 0
    %p123 = por %p121, %p122
    %s125 = sadd.s32 %s124, 1
    %p128 = scmp.eq.s32.totalorder %s15, 3
    %p129 = scmp.ne.s32.totalorder %s124, %s126
    %p130 = scmp.eq.s32.totalorder %s15, 0
    %p131 = por %p129, %p130
    %p132 = scmp.ne.s32.totalorder %s124, %s126
    %p133 = scmp.eq.s32.totalorder %s20, 3
    %p134 = por %p132, %p133
    %p135 = scmp.ne.s32.totalorder %s126, %s127
    %p136 = scmp.eq.s32.totalorder %s20, 0
    %p137 = por %p135, %p136
    %p138 = scmp.ne.s32.totalorder %s126, %s127
    %p139 = scmp.eq.s32.totalorder %s21, 3
    %p140 = por %p138, %p139
    %p142 = scmp.ne.s32.totalorder %s127, %s141
    %p143 = scmp.eq.s32.totalorder %s21, 0
    %p144 = por %p142, %p143
    %s146 = sadd.s32 %s145, 1
    %p149 = scmp.eq.s32.totalorder %s15, 3
    %p150 = scmp.ne.s32.totalorder %s145, %s147
    %p151 = scmp.eq.s32.totalorder %s15, 0
    %p152 = por %p150, %p151
    %p153 = scmp.ne.s32.totalorder %s145, %s147
    %p154 = scmp.eq.s32.totalorder %s20, 3
    %p155 = por %p153, %p154
    %p156 = scmp.ne.s32.totalorder %s147, %s148
    %p157 = scmp.eq.s32.totalorder %s20, 0
    %p158 = por %p156, %p157
    %p159 = scmp.ne.s32.totalorder %s147, %s148
    %p160 = scmp.eq.s32.totalorder %s21, 3
    %p161 = por %p159, %p160
    %p163 = scmp.ne.s32.totalorder %s148, %s162
    %p164 = scmp.eq.s32.totalorder %s21, 0
    %p165 = por %p163, %p164
    %s167 = sadd.s32 %s166, 1
    %p170 = scmp.eq.s32.totalorder %s15, 3
    %p171 = scmp.ne.s32.totalorder %s166, %s168
    %p172 = scmp.eq.s32.totalorder %s15, 0
    %p173 = por %p171, %p172
    %p174 = scmp.ne.s32.totalorder %s166, %s168
    %p175 = scmp.eq.s32.totalorder %s20, 3
    %p176 = por %p174, %p175
    %p177 = scmp.ne.s32.totalorder %s168, %s169
    %p178 = scmp.eq.s32.totalorder %s20, 0
    %p179 = por %p177, %p178
    %p180 = scmp.ne.s32.totalorder %s168, %s169
    %p181 = scmp.eq.s32.totalorder %s21, 3
    %p182 = por %p180, %p181
    %p184 = scmp.ne.s32.totalorder %s169, %s183
    %p185 = scmp.eq.s32.totalorder %s21, 0
    %p186 = por %p184, %p185
    %s188 = sadd.s32 %s187, 1
    %p191 = scmp.eq.s32.totalorder %s15, 3
    %p192 = scmp.ne.s32.totalorder %s187, %s189
    %p193 = scmp.eq.s32.totalorder %s15, 0
    %p194 = por %p192, %p193
    %p195 = scmp.ne.s32.totalorder %s187, %s189
    %p196 = scmp.eq.s32.totalorder %s20, 3
    %p197 = por %p195, %p196
    %p198 = scmp.ne.s32.totalorder %s189, %s190
    %p199 = scmp.eq.s32.totalorder %s20, 0
    %p200 = por %p198, %p199
    %p201 = scmp.ne.s32.totalorder %s189, %s190
    %p202 = scmp.eq.s32.totalorder %s21, 3
    %p203 = por %p201, %p202
    %p205 = scmp.ne.s32.totalorder %s190, %s204
    %p206 = scmp.eq.s32.totalorder %s21, 0
    %p207 = por %p205, %p206
    %s209 = sadd.s32 %s208, 1
    %p212 = scmp.eq.s32.totalorder %s15, 3
    %p213 = scmp.ne.s32.totalorder %s208, %s210
    %p214 = scmp.eq.s32.totalorder %s15, 0
    %p215 = por %p213, %p214
    %p216 = scmp.ne.s32.totalorder %s208, %s210
    %p217 = scmp.eq.s32.totalorder %s20, 3
    %p218 = por %p216, %p217
    %p219 = scmp.ne.s32.totalorder %s210, %s211
    %p220 = scmp.eq.s32.totalorder %s20, 0
    %p221 = por %p219, %p220
    %p222 = scmp.ne.s32.totalorder %s210, %s211
    %p223 = scmp.eq.s32.totalorder %s21, 3
    %p224 = por %p222, %p223
    %p226 = scmp.ne.s32.totalorder %s211, %s225
    %p227 = scmp.eq.s32.totalorder %s21, 0
    %p228 = por %p226, %p227
    %s229 = ssub.s32 %s22, %s34
    %s230 = ssub.s32 %s23, %s30
    %s231 = sor.u32 %s229, %s230
    %p232 = scmp.eq.s32.totalorder %s231, 0
    %s234 = sadd.s32 %s233, 1
    %s235 = scalar_select %p232, %s233, %s234
    %p238 = pneg %p232
    %p239 = scmp.eq.s32.totalorder %s15, 3
    %p240 = por %p238, %p239
    %p241 = scmp.ne.s32.totalorder %s233, %s236
    %p242 = scmp.eq.s32.totalorder %s15, 0
    %p243 = por %p241, %p242
    %p244 = scmp.ne.s32.totalorder %s233, %s236
    %p245 = scmp.eq.s32.totalorder %s20, 3
    %p246 = por %p244, %p245
    %p247 = scmp.ne.s32.totalorder %s236, %s237
    %p248 = scmp.eq.s32.totalorder %s20, 0
    %p249 = por %p247, %p248
    %p250 = scmp.ne.s32.totalorder %s236, %s237
    %p251 = scmp.eq.s32.totalorder %s21, 3
    %p252 = por %p250, %p251
    %p254 = scmp.ne.s32.totalorder %s237, %s253
    %p255 = scmp.eq.s32.totalorder %s21, 0
    %p256 = por %p254, %p255
    %p257 = scmp.le.s32.totalorder 1, %s15
    %p258 = scmp.lt.s32.totalorder %s15, 5
    %p259 = pnand %p257, %p258
    %p260 = pneg %p259
    // Predicated region
    $region9: #{tpu_custom_call.1} parent=5 // pred_check
      _
    $region10: #{tpu_custom_call.1} parent=5 // pred_check_branch
      %262 = sbr.rel (%p259) target = $region12
    $region11: #{tpu_custom_call.1} parent=5 // pred_region
      %s263 = ssub.s32 %s15, 1
      // Predicated region
      $region13: #{tpu_custom_call.1} parent=11 // pred_check
        %p264 = pneg %p74
      $region14: #{tpu_custom_call.1} parent=11 // pred_check_branch
        %266 = sbr.rel (%p264) target = $region16
      $region15: #{tpu_custom_call.1} parent=11 // pred_region
        _
      $region16: #{tpu_custom_call.1} parent=11 // pred_fallthru
        _
      // Predicated region
      $region17: #{tpu_custom_call.1} parent=11 // pred_check
        %p267 = pneg %p95
      $region18: #{tpu_custom_call.1} parent=11 // pred_check_branch
        %269 = sbr.rel (%p267) target = $region20
      $region19: #{tpu_custom_call.1} parent=11 // pred_region
        _
      $region20: #{tpu_custom_call.1} parent=11 // pred_fallthru
        _
      // Predicated region
      $region21: #{tpu_custom_call.1} parent=11 // pred_check
        %p270 = pneg %p116
      $region22: #{tpu_custom_call.1} parent=11 // pred_check_branch
        %272 = sbr.rel (%p270) target = $region24
      $region23: #{tpu_custom_call.1} parent=11 // pred_region
        _
      $region24: #{tpu_custom_call.1} parent=11 // pred_fallthru
        _
      // Predicated region
      $region25: #{tpu_custom_call.1} parent=11 // pred_check
        %p273 = pneg %p137
      $region26: #{tpu_custom_call.1} parent=11 // pred_check_branch
        %275 = sbr.rel (%p273) target = $region28
      $region27: #{tpu_custom_call.1} parent=11 // pred_region
        _
      $region28: #{tpu_custom_call.1} parent=11 // pred_fallthru
        _
      // Predicated region
      $region29: #{tpu_custom_call.1} parent=11 // pred_check
        %p276 = pneg %p158
      $region30: #{tpu_custom_call.1} parent=11 // pred_check_branch
        %278 = sbr.rel (%p276) target = $region32
      $region31: #{tpu_custom_call.1} parent=11 // pred_region
        _
      $region32: #{tpu_custom_call.1} parent=11 // pred_fallthru
        _
      // Predicated region
      $region33: #{tpu_custom_call.1} parent=11 // pred_check
        %p279 = pneg %p179
      $region34: #{tpu_custom_call.1} parent=11 // pred_check_branch
        %281 = sbr.rel (%p279) target = $region36
      $region35: #{tpu_custom_call.1} parent=11 // pred_region
        _
      $region36: #{tpu_custom_call.1} parent=11 // pred_fallthru
        _
      // Predicated region
      $region37: #{tpu_custom_call.1} parent=11 // pred_check
        %p282 = pneg %p200
      $region38: #{tpu_custom_call.1} parent=11 // pred_check_branch
        %284 = sbr.rel (%p282) target = $region40
      $region39: #{tpu_custom_call.1} parent=11 // pred_region
        _
      $region40: #{tpu_custom_call.1} parent=11 // pred_fallthru
        _
      // Predicated region
      $region41: #{tpu_custom_call.1} parent=11 // pred_check
        %p285 = pneg %p221
      $region42: #{tpu_custom_call.1} parent=11 // pred_check_branch
        %287 = sbr.rel (%p285) target = $region44
      $region43: #{tpu_custom_call.1} parent=11 // pred_region
        _
      $region44: #{tpu_custom_call.1} parent=11 // pred_fallthru
        _
    $region12: #{tpu_custom_call.1} parent=5 // pred_fallthru
      _
    %p288 = scmp.lt.s32.totalorder %s15, 4
    // Predicated region
    $region45: #{tpu_custom_call.1} parent=5 // pred_check
      %p289 = pneg %p288
    $region46: #{tpu_custom_call.1} parent=5 // pred_check_branch
      %291 = sbr.rel (%p289) target = $region48
    $region47: #{tpu_custom_call.1} parent=5 // pred_region
      // Predicated region
      $region49: #{tpu_custom_call.1} parent=47 // pred_check
        %p292 = pneg %p47
      $region50: #{tpu_custom_call.1} parent=47 // pred_check_branch
        %294 = sbr.rel (%p292) target = $region52
      $region51: #{tpu_custom_call.1} parent=47 // pred_region
        %p295 = scmp.lt.s32.totalorder %s22, 1
        %s296 = scalar_select %p295, %s22, 1
        %s297 = smul.addr %s296, 8
        %s298 = smul.addr %s297, 8
        %s299 = scalar_lea.vmem %s0, %s298
      $region52: #{tpu_custom_call.1} parent=47 // pred_fallthru
        _
    $region48: #{tpu_custom_call.1} parent=5 // pred_fallthru
      _
    %p300 = scmp.le.s32.totalorder 1, %s15
    %p301 = scmp.lt.s32.totalorder %s15, 5
    %p302 = pnand %p300, %p301
    %p303 = pneg %p302
    // Predicated region
    $region53: #{tpu_custom_call.1} parent=5 // pred_check
      _
    $region54: #{tpu_custom_call.1} parent=5 // pred_check_branch
      %305 = sbr.rel (%p302) target = $region56
    $region55: #{tpu_custom_call.1} parent=5 // pred_region
      %s306 = ssub.s32 %s15, 1
      %p307 = scmp.lt.s32.totalorder %s24, 1
      %s308 = scalar_select %p307, %s24, 1
      %s309 = smul.addr %s308, 8
      %s310 = smul.addr %s309, 8
      %s311 = scalar_lea.vmem %s0, %s310
      %p312 = pneg %p53
      %p313 = pneg %p50
      %p314 = pneg %p74
      %p315 = pneg %p71
      %p316 = pneg %p95
      %p317 = pneg %p92
      %p318 = pneg %p116
      %p319 = pneg %p113
      %p320 = pneg %p137
      %p321 = pneg %p134
      %p322 = pneg %p158
      %p323 = pneg %p155
      %p324 = pneg %p179
      %p325 = pneg %p176
      %p326 = pneg %p200
      %p327 = pneg %p197
      %p328 = pneg %p221
      %p329 = pneg %p218
      %p330 = pneg %p249
      %p331 = pneg %p246
      %s332 = smul.u32 4, %s25
      %p333 = scmp.lt.s32.totalorder %s24, 1
      %s334 = scalar_select %p333, %s24, 1
      %p335 = scmp.lt.s32.totalorder %s332, 7
      %s336 = scalar_select %p335, %s332, 7
      %s337 = smul.addr %s334, 8
      %s338 = sadd.s32 %s336, %s337
      %s339 = smul.addr %s338, 8
      %s340 = scalar_lea.vmem %s9, %s339
      %p341 = scmp.lt.s32.totalorder %s24, 1
      %s342 = scalar_select %p341, %s24, 1
      %s343 = smul.addr %s342, 8
      %s344 = smul.addr %s343, 8
      %s345 = scalar_lea.vmem %s0, %s344
      %s346 = smul.u32 4, %s25
      %p347 = scmp.lt.s32.totalorder %s24, 1
      %s348 = scalar_select %p347, %s24, 1
      %p349 = scmp.lt.s32.totalorder %s346, 7
      %s350 = scalar_select %p349, %s346, 7
      %s351 = smul.addr %s348, 8
      %s352 = sadd.s32 %s350, %s351
      %s353 = smul.addr %s352, 8
      %s354 = scalar_lea.vmem %s9, %s353
      %s355 = smul.u32 4, %s25
      %p357 = scmp.eq.s32.totalorder %s25, 0
      // Predicated region
      $region57: #{tpu_custom_call.1} parent=55 // pred_check
        %p358 = pneg %p357
      $region58: #{tpu_custom_call.1} parent=55 // pred_check_branch
        %360 = sbr.rel (%p358) target = $region60
      $region59: #{tpu_custom_call.1} parent=55 // pred_region
        %v361 = vld [vmem:[%s345] sm:$0xff]
        %v362 = vld [vmem:[%s345 + $0x8] sm:$0xff]
        %v363 = vld [vmem:[%s345 + $0x10] sm:$0xff]
        %v364 = vld [vmem:[%s345 + $0x18] sm:$0xff]
        %v365 = vld [vmem:[%s345 + $0x20] sm:$0xff]
        %v366 = vld [vmem:[%s345 + $0x28] sm:$0xff]
        %v367 = vld [vmem:[%s345 + $0x30] sm:$0xff]
        %v368 = vld [vmem:[%s345 + $0x38] sm:$0xff]
        %v377 = vcombine.high %v361, %v361
        %v379 = vunpack.c.l.s4 1983009808
        %v380 = vunpack.c.0.s8 %v379
        %v381 = vlaneseq
        %v382 = vshrl.u32 %v381, 7
        %v383 = vsub.s32 %v380, %v382
        %v384 = vrot.slane %v361, %v383
        %v386 = vunpack.c.l.s4 1983009808
        %v387 = vunpack.c.0.s8 %v386
        %v388 = vlaneseq
        %v389 = vshrl.u32 %v388, 7
        %v390 = vsub.s32 %v387, %v389
        %v391 = vrot.slane %v377, %v390
        %v392 = vcombine.high %v384, %v384
        %v393 = vcombine.high %v391, %v391
        %v394 = vcombine.high %v362, %v362
        %v396 = vunpack.c.l.s4 1983009808
        %v397 = vunpack.c.0.s8 %v396
        %v398 = vlaneseq
        %v399 = vshrl.u32 %v398, 7
        %v400 = vsub.s32 %v397, %v399
        %v401 = vrot.slane %v362, %v400
        %v403 = vunpack.c.l.s4 1983009808
        %v404 = vunpack.c.0.s8 %v403
        %v405 = vlaneseq
        %v406 = vshrl.u32 %v405, 7
        %v407 = vsub.s32 %v404, %v406
        %v408 = vrot.slane %v394, %v407
        %v409 = vcombine.high %v401, %v401
        %v410 = vcombine.high %v408, %v408
        %v411 = vcombine.high %v363, %v363
        %v413 = vunpack.c.l.s4 1983009808
        %v414 = vunpack.c.0.s8 %v413
        %v415 = vlaneseq
        %v416 = vshrl.u32 %v415, 7
        %v417 = vsub.s32 %v414, %v416
        %v418 = vrot.slane %v363, %v417
        %v420 = vunpack.c.l.s4 1983009808
        %v421 = vunpack.c.0.s8 %v420
        %v422 = vlaneseq
        %v423 = vshrl.u32 %v422, 7
        %v424 = vsub.s32 %v421, %v423
        %v425 = vrot.slane %v411, %v424
        %v426 = vcombine.high %v418, %v418
        %v427 = vcombine.high %v425, %v425
        %v428 = vcombine.high %v364, %v364
        %v430 = vunpack.c.l.s4 1983009808
        %v431 = vunpack.c.0.s8 %v430
        %v432 = vlaneseq
        %v433 = vshrl.u32 %v432, 7
        %v434 = vsub.s32 %v431, %v433
        %v435 = vrot.slane %v364, %v434
        %v437 = vunpack.c.l.s4 1983009808
        %v438 = vunpack.c.0.s8 %v437
        %v439 = vlaneseq
        %v440 = vshrl.u32 %v439, 7
        %v441 = vsub.s32 %v438, %v440
        %v442 = vrot.slane %v428, %v441
        %v443 = vcombine.high %v435, %v435
        %v444 = vcombine.high %v442, %v442
        %v445 = vcombine.high %v365, %v365
        %v447 = vunpack.c.l.s4 1983009808
        %v448 = vunpack.c.0.s8 %v447
        %v449 = vlaneseq
        %v450 = vshrl.u32 %v449, 7
        %v451 = vsub.s32 %v448, %v450
        %v452 = vrot.slane %v365, %v451
        %v454 = vunpack.c.l.s4 1983009808
        %v455 = vunpack.c.0.s8 %v454
        %v456 = vlaneseq
        %v457 = vshrl.u32 %v456, 7
        %v458 = vsub.s32 %v455, %v457
        %v459 = vrot.slane %v445, %v458
        %v460 = vcombine.high %v452, %v452
        %v461 = vcombine.high %v459, %v459
        %v462 = vcombine.high %v366, %v366
        %v464 = vunpack.c.l.s4 1983009808
        %v465 = vunpack.c.0.s8 %v464
        %v466 = vlaneseq
        %v467 = vshrl.u32 %v466, 7
        %v468 = vsub.s32 %v465, %v467
        %v469 = vrot.slane %v366, %v468
        %v471 = vunpack.c.l.s4 1983009808
        %v472 = vunpack.c.0.s8 %v471
        %v473 = vlaneseq
        %v474 = vshrl.u32 %v473, 7
        %v475 = vsub.s32 %v472, %v474
        %v476 = vrot.slane %v462, %v475
        %v477 = vcombine.high %v469, %v469
        %v478 = vcombine.high %v476, %v476
        %v479 = vcombine.high %v367, %v367
        %v481 = vunpack.c.l.s4 1983009808
        %v482 = vunpack.c.0.s8 %v481
        %v483 = vlaneseq
        %v484 = vshrl.u32 %v483, 7
        %v485 = vsub.s32 %v482, %v484
        %v486 = vrot.slane %v367, %v485
        %v488 = vunpack.c.l.s4 1983009808
        %v489 = vunpack.c.0.s8 %v488
        %v490 = vlaneseq
        %v491 = vshrl.u32 %v490, 7
        %v492 = vsub.s32 %v489, %v491
        %v493 = vrot.slane %v479, %v492
        %v494 = vcombine.high %v486, %v486
        %v495 = vcombine.high %v493, %v493
        %v496 = vcombine.high %v368, %v368
        %v498 = vunpack.c.l.s4 1983009808
        %v499 = vunpack.c.0.s8 %v498
        %v500 = vlaneseq
        %v501 = vshrl.u32 %v500, 7
        %v502 = vsub.s32 %v499, %v501
        %v503 = vrot.slane %v368, %v502
        %v505 = vunpack.c.l.s4 1983009808
        %v506 = vunpack.c.0.s8 %v505
        %v507 = vlaneseq
        %v508 = vshrl.u32 %v507, 7
        %v509 = vsub.s32 %v506, %v508
        %v510 = vrot.slane %v496, %v509
        %v511 = vcombine.high %v503, %v503
        %v512 = vcombine.high %v510, %v510
        %v545 = vld [vmem:[%s4] sm:$0x1]
        %v547 = vlaneseq
        %v548 = vshrl.u32 %v547, 7
        %v549 = vsub.s32 0, %v548
        %v550 = vrot.slane %v545, %v549
        %v552 = vadd.f32 %v550, 0.0
        %v553 = vld [vmem:[%s3] sm:$0xff]
        %v554 = vld [vmem:[%s3 + $0x8] sm:$0xff]
        %v555 = vld [vmem:[%s3 + $0x10] sm:$0xff]
        %v556 = vld [vmem:[%s3 + $0x18] sm:$0xff]
        %v557 = vpack.c.bf16 %v384, %v384
        %v558 = vpack.c.bf16 %v392, %v392
        %v559 = vpack.c.bf16 %v391, %v391
        %v560 = vpack.c.bf16 %v393, %v393
        %v561 = vpack.c.bf16 %v418, %v418
        %v562 = vpack.c.bf16 %v426, %v426
        %v563 = vpack.c.bf16 %v425, %v425
        %v564 = vpack.c.bf16 %v427, %v427
        %v565 = vpack.c.bf16 %v452, %v452
        %v566 = vpack.c.bf16 %v460, %v460
        %v567 = vpack.c.bf16 %v459, %v459
        %v568 = vpack.c.bf16 %v461, %v461
        %v569 = vpack.c.bf16 %v486, %v486
        %v570 = vpack.c.bf16 %v494, %v494
        %v571 = vpack.c.bf16 %v493, %v493
        %v572 = vpack.c.bf16 %v495, %v495
        %v573 = vpack.c.bf16 %v554, %v553
        %v574 = vpack.c.bf16 %v556, %v555
        %v591 = vunpack.c.l.b16 %v557
        %v592 = vunpack.c.l.b16 %v558
        %v593 = vunpack.c.l.b16 %v559
        %v594 = vunpack.c.l.b16 %v560
        %v595 = vunpack.c.l.b16 %v561
        %v596 = vunpack.c.l.b16 %v562
        %v597 = vunpack.c.l.b16 %v563
        %v598 = vunpack.c.l.b16 %v564
        %v599 = vunpack.c.l.b16 %v565
        %v600 = vunpack.c.l.b16 %v566
        %v601 = vunpack.c.l.b16 %v567
        %v602 = vunpack.c.l.b16 %v568
        %v603 = vunpack.c.l.b16 %v569
        %v604 = vunpack.c.l.b16 %v570
        %v605 = vunpack.c.l.b16 %v571
        %v606 = vunpack.c.l.b16 %v572
        %v607 = vrot.slane %v592, 7
        %vm608 = vcmask 1041409
        %v609 = vsel %vm608, %v607, %v591
        %v610 = vrot.slane %v593, 6
        %vm611 = vcmask 1042434
        %v612 = vsel %vm611, %v610, %v609
        %v613 = vrot.slane %v594, 5
        %vm614 = vcmask 1043459
        %v615 = vsel %vm614, %v613, %v612
        %v616 = vrot.slane %v595, 4
        %vm617 = vcmask 1044484
        %v618 = vsel %vm617, %v616, %v615
        %v619 = vrot.slane %v596, 3
        %vm620 = vcmask 1045509
        %v621 = vsel %vm620, %v619, %v618
        %v622 = vrot.slane %v597, 2
        %vm623 = vcmask 1046534
        %v624 = vsel %vm623, %v622, %v621
        %v625 = vrot.slane %v598, 1
        %vm626 = vcmask 1047559
        %v627 = vsel %vm626, %v625, %v624
        %v628 = vrot.slane %v600, 7
        %v629 = vsel %vm608, %v628, %v599
        %v630 = vrot.slane %v601, 6
        %v631 = vsel %vm611, %v630, %v629
        %v632 = vrot.slane %v602, 5
        %v633 = vsel %vm614, %v632, %v631
        %v634 = vrot.slane %v603, 4
        %v635 = vsel %vm617, %v634, %v633
        %v636 = vrot.slane %v604, 3
        %v637 = vsel %vm620, %v636, %v635
        %v638 = vrot.slane %v605, 2
        %v639 = vsel %vm623, %v638, %v637
        %v640 = vrot.slane %v606, 1
        %v641 = vsel %vm626, %v640, %v639
        %v642 = vpack.c.b16 %v641, %v627
        %vm643 = vcmask 261120
        %v645 = vsel %vm643, %v642, 0
        %647 = vmatprep.subr.bf16.mxu0 0
        %648 = vmatpush1.bf16.msra.mxu0 0
        %649 = vmatprep.subr.bf16.mxu0 0
        %650 = vmatpush1.bf16.msra.mxu0 0
        %651 = vmatprep.subr.bf16.mxu0 0
        %652 = vmatpush1.bf16.msra.mxu0 0
        %653 = vmatprep.subr.bf16.mxu0 0
        %654 = vmatpush1.bf16.msra.mxu0 0
        %655 = vmatprep.subr.bf16.mxu0 0
        %656 = vmatpush1.bf16.msra.mxu0 0
        %657 = vmatprep.subr.bf16.mxu0 0
        %658 = vmatpush1.bf16.msra.mxu0 0
        %659 = vmatprep.subr.bf16.mxu0 0
        %660 = vmatpush1.bf16.msra.mxu0 %v574
        %661 = vmatprep.subr.bf16.mxu0 0
        %662 = vmatpush1.bf16.msra.mxu0 %v573
        %663 = vmatprep.subr.bf16.mxu0 0
        %664 = vmatpush2.bf16.msra.mxu0 0
        %665 = vmatprep.subr.bf16.mxu0 0
        %666 = vmatpush2.bf16.msra.mxu0 0
        %667 = vmatprep.subr.bf16.mxu0 0
        %668 = vmatpush2.bf16.msra.mxu0 0
        %669 = vmatprep.subr.bf16.mxu0 0
        %670 = vmatpush2.bf16.msra.mxu0 0
        %671 = vmatprep.subr.bf16.mxu0 0
        %672 = vmatpush2.bf16.msra.mxu0 0
        %673 = vmatprep.subr.bf16.mxu0 0
        %674 = vmatpush2.bf16.msra.mxu0 0
        %675 = vmatprep.subr.bf16.mxu0 0
        %676 = vmatpush2.bf16.msra.mxu0 0
        %677 = vmatprep.subr.bf16.mxu0 0
        %678 = vmatpush2.bf16.msra.mxu0 0
        %679 = vmatprep.mubr.bf16.mxu0 0
        %680 = vmatmul.mubr.bf16.gmra.mxu0 %v645
        %v681 = vpop.f32.mrf.mxu0
        %v682 = vadd.f32 0.0, %v681
        %v683 = vpop.f32.mrf.mxu0
        %v684 = vpop.f32.mrf.mxu0
        %v685 = vadd.f32 0.0, %v684
        %v686 = vpop.f32.mrf.mxu0
        %687 = vdwg.mxu0
        %v688 = vadd.f32 %v552, %v682
        %v689 = vadd.f32 %v552, %v685
        %v690 = vld [vmem:[%s3 + $0x20] sm:$0xff]
        %v691 = vld [vmem:[%s3 + $0x28] sm:$0xff]
        %v692 = vld [vmem:[%s3 + $0x30] sm:$0xff]
        %v693 = vld [vmem:[%s3 + $0x38] sm:$0xff]
        %v694 = vpack.c.bf16 %v691, %v690
        %v695 = vpack.c.bf16 %v693, %v692
        %v696 = vrot.slane %v591, 1
        %v697 = vsel %vm608, %v592, %v696
        %v698 = vrot.slane %v593, 7
        %v699 = vsel %vm611, %v698, %v697
        %v700 = vrot.slane %v594, 6
        %v701 = vsel %vm614, %v700, %v699
        %v702 = vrot.slane %v595, 5
        %v703 = vsel %vm617, %v702, %v701
        %v704 = vrot.slane %v596, 4
        %v705 = vsel %vm620, %v704, %v703
        %v706 = vrot.slane %v597, 3
        %v707 = vsel %vm623, %v706, %v705
        %v708 = vrot.slane %v598, 2
        %v709 = vsel %vm626, %v708, %v707
        %v710 = vrot.slane %v599, 1
        %v711 = vsel %vm608, %v600, %v710
        %v712 = vrot.slane %v601, 7
        %v713 = vsel %vm611, %v712, %v711
        %v714 = vrot.slane %v602, 6
        %v715 = vsel %vm614, %v714, %v713
        %v716 = vrot.slane %v603, 5
        %v717 = vsel %vm617, %v716, %v715
        %v718 = vrot.slane %v604, 4
        %v719 = vsel %vm620, %v718, %v717
        %v720 = vrot.slane %v605, 3
        %v721 = vsel %vm623, %v720, %v719
        %v722 = vrot.slane %v606, 2
        %v723 = vsel %vm626, %v722, %v721
        %v724 = vpack.c.b16 %v723, %v709
        %v726 = vsel %vm643, %v724, 0
        %728 = vmatprep.subr.bf16.mxu0 0
        %729 = vmatpush1.bf16.msra.mxu0 0
        %730 = vmatprep.subr.bf16.mxu0 0
        %731 = vmatpush1.bf16.msra.mxu0 0
        %732 = vmatprep.subr.bf16.mxu0 0
        %733 = vmatpush1.bf16.msra.mxu0 0
        %734 = vmatprep.subr.bf16.mxu0 0
        %735 = vmatpush1.bf16.msra.mxu0 0
        %736 = vmatprep.subr.bf16.mxu0 0
        %737 = vmatpush1.bf16.msra.mxu0 0
        %738 = vmatprep.subr.bf16.mxu0 0
        %739 = vmatpush1.bf16.msra.mxu0 0
        %740 = vmatprep.subr.bf16.mxu0 0
        %741 = vmatpush1.bf16.msra.mxu0 %v695
        %742 = vmatprep.subr.bf16.mxu0 0
        %743 = vmatpush1.bf16.msra.mxu0 %v694
        %744 = vmatprep.subr.bf16.mxu0 0
        %745 = vmatpush2.bf16.msra.mxu0 0
        %746 = vmatprep.subr.bf16.mxu0 0
        %747 = vmatpush2.bf16.msra.mxu0 0
        %748 = vmatprep.subr.bf16.mxu0 0
        %749 = vmatpush2.bf16.msra.mxu0 0
        %750 = vmatprep.subr.bf16.mxu0 0
        %751 = vmatpush2.bf16.msra.mxu0 0
        %752 = vmatprep.subr.bf16.mxu0 0
        %753 = vmatpush2.bf16.msra.mxu0 0
        %754 = vmatprep.subr.bf16.mxu0 0
        %755 = vmatpush2.bf16.msra.mxu0 0
        %756 = vmatprep.subr.bf16.mxu0 0
        %757 = vmatpush2.bf16.msra.mxu0 0
        %758 = vmatprep.subr.bf16.mxu0 0
        %759 = vmatpush2.bf16.msra.mxu0 0
        %760 = vmatprep.mubr.bf16.mxu0 0
        %761 = vmatmul.mubr.bf16.gmra.mxu0 %v726
        %v762 = vpop.f32.mrf.mxu0
        %v763 = vadd.f32 0.0, %v762
        %v764 = vpop.f32.mrf.mxu0
        %v765 = vpop.f32.mrf.mxu0
        %v766 = vadd.f32 0.0, %v765
        %v767 = vpop.f32.mrf.mxu0
        %768 = vdwg.mxu0
        %v769 = vadd.f32 %v688, %v763
        %v770 = vadd.f32 %v689, %v766
        %v771 = vld [vmem:[%s3 + $0x40] sm:$0xff]
        %v772 = vld [vmem:[%s3 + $0x48] sm:$0xff]
        %v773 = vld [vmem:[%s3 + $0x50] sm:$0xff]
        %v774 = vld [vmem:[%s3 + $0x58] sm:$0xff]
        %v775 = vpack.c.bf16 %v401, %v401
        %v776 = vpack.c.bf16 %v409, %v409
        %v777 = vpack.c.bf16 %v408, %v408
        %v778 = vpack.c.bf16 %v410, %v410
        %v779 = vpack.c.bf16 %v435, %v435
        %v780 = vpack.c.bf16 %v443, %v443
        %v781 = vpack.c.bf16 %v442, %v442
        %v782 = vpack.c.bf16 %v444, %v444
        %v783 = vpack.c.bf16 %v469, %v469
        %v784 = vpack.c.bf16 %v477, %v477
        %v785 = vpack.c.bf16 %v476, %v476
        %v786 = vpack.c.bf16 %v478, %v478
        %v787 = vpack.c.bf16 %v503, %v503
        %v788 = vpack.c.bf16 %v511, %v511
        %v789 = vpack.c.bf16 %v510, %v510
        %v790 = vpack.c.bf16 %v512, %v512
        %v791 = vpack.c.bf16 %v772, %v771
        %v792 = vpack.c.bf16 %v774, %v773
        %v809 = vunpack.c.l.b16 %v775
        %v810 = vunpack.c.l.b16 %v776
        %v811 = vunpack.c.l.b16 %v777
        %v812 = vunpack.c.l.b16 %v778
        %v813 = vunpack.c.l.b16 %v779
        %v814 = vunpack.c.l.b16 %v780
        %v815 = vunpack.c.l.b16 %v781
        %v816 = vunpack.c.l.b16 %v782
        %v817 = vunpack.c.l.b16 %v783
        %v818 = vunpack.c.l.b16 %v784
        %v819 = vunpack.c.l.b16 %v785
        %v820 = vunpack.c.l.b16 %v786
        %v821 = vunpack.c.l.b16 %v787
        %v822 = vunpack.c.l.b16 %v788
        %v823 = vunpack.c.l.b16 %v789
        %v824 = vunpack.c.l.b16 %v790
        %v825 = vrot.slane %v810, 7
        %v826 = vsel %vm608, %v825, %v809
        %v827 = vrot.slane %v811, 6
        %v828 = vsel %vm611, %v827, %v826
        %v829 = vrot.slane %v812, 5
        %v830 = vsel %vm614, %v829, %v828
        %v831 = vrot.slane %v813, 4
        %v832 = vsel %vm617, %v831, %v830
        %v833 = vrot.slane %v814, 3
        %v834 = vsel %vm620, %v833, %v832
        %v835 = vrot.slane %v815, 2
        %v836 = vsel %vm623, %v835, %v834
        %v837 = vrot.slane %v816, 1
        %v838 = vsel %vm626, %v837, %v836
        %v839 = vrot.slane %v818, 7
        %v840 = vsel %vm608, %v839, %v817
        %v841 = vrot.slane %v819, 6
        %v842 = vsel %vm611, %v841, %v840
        %v843 = vrot.slane %v820, 5
        %v844 = vsel %vm614, %v843, %v842
        %v845 = vrot.slane %v821, 4
        %v846 = vsel %vm617, %v845, %v844
        %v847 = vrot.slane %v822, 3
        %v848 = vsel %vm620, %v847, %v846
        %v849 = vrot.slane %v823, 2
        %v850 = vsel %vm623, %v849, %v848
        %v851 = vrot.slane %v824, 1
        %v852 = vsel %vm626, %v851, %v850
        %v853 = vpack.c.b16 %v852, %v838
        %v855 = vsel %vm643, %v853, 0
        %857 = vmatprep.subr.bf16.mxu0 0
        %858 = vmatpush1.bf16.msra.mxu0 0
        %859 = vmatprep.subr.bf16.mxu0 0
        %860 = vmatpush1.bf16.msra.mxu0 0
        %861 = vmatprep.subr.bf16.mxu0 0
        %862 = vmatpush1.bf16.msra.mxu0 0
        %863 = vmatprep.subr.bf16.mxu0 0
        %864 = vmatpush1.bf16.msra.mxu0 0
        %865 = vmatprep.subr.bf16.mxu0 0
        %866 = vmatpush1.bf16.msra.mxu0 0
        %867 = vmatprep.subr.bf16.mxu0 0
        %868 = vmatpush1.bf16.msra.mxu0 0
        %869 = vmatprep.subr.bf16.mxu0 0
        %870 = vmatpush1.bf16.msra.mxu0 %v792
        %871 = vmatprep.subr.bf16.mxu0 0
        %872 = vmatpush1.bf16.msra.mxu0 %v791
        %873 = vmatprep.subr.bf16.mxu0 0
        %874 = vmatpush2.bf16.msra.mxu0 0
        %875 = vmatprep.subr.bf16.mxu0 0
        %876 = vmatpush2.bf16.msra.mxu0 0
        %877 = vmatprep.subr.bf16.mxu0 0
        %878 = vmatpush2.bf16.msra.mxu0 0
        %879 = vmatprep.subr.bf16.mxu0 0
        %880 = vmatpush2.bf16.msra.mxu0 0
        %881 = vmatprep.subr.bf16.mxu0 0
        %882 = vmatpush2.bf16.msra.mxu0 0
        %883 = vmatprep.subr.bf16.mxu0 0
        %884 = vmatpush2.bf16.msra.mxu0 0
        %885 = vmatprep.subr.bf16.mxu0 0
        %886 = vmatpush2.bf16.msra.mxu0 0
        %887 = vmatprep.subr.bf16.mxu0 0
        %888 = vmatpush2.bf16.msra.mxu0 0
        %889 = vmatprep.mubr.bf16.mxu0 0
        %890 = vmatmul.mubr.bf16.gmra.mxu0 %v855
        %v891 = vpop.f32.mrf.mxu0
        %v892 = vadd.f32 0.0, %v891
        %v893 = vpop.f32.mrf.mxu0
        %v894 = vpop.f32.mrf.mxu0
        %v895 = vadd.f32 0.0, %v894
        %v896 = vpop.f32.mrf.mxu0
        %897 = vdwg.mxu0
        %v898 = vadd.f32 %v769, %v892
        %v899 = vadd.f32 %v770, %v895
        %v900 = vld [vmem:[%s3 + $0x60] sm:$0xff]
        %v901 = vld [vmem:[%s3 + $0x68] sm:$0xff]
        %v902 = vld [vmem:[%s3 + $0x70] sm:$0xff]
        %v903 = vld [vmem:[%s3 + $0x78] sm:$0xff]
        %v904 = vpack.c.bf16 %v901, %v900
        %v905 = vpack.c.bf16 %v903, %v902
        %v906 = vrot.slane %v809, 1
        %v907 = vsel %vm608, %v810, %v906
        %v908 = vrot.slane %v811, 7
        %v909 = vsel %vm611, %v908, %v907
        %v910 = vrot.slane %v812, 6
        %v911 = vsel %vm614, %v910, %v909
        %v912 = vrot.slane %v813, 5
        %v913 = vsel %vm617, %v912, %v911
        %v914 = vrot.slane %v814, 4
        %v915 = vsel %vm620, %v914, %v913
        %v916 = vrot.slane %v815, 3
        %v917 = vsel %vm623, %v916, %v915
        %v918 = vrot.slane %v816, 2
        %v919 = vsel %vm626, %v918, %v917
        %v920 = vrot.slane %v817, 1
        %v921 = vsel %vm608, %v818, %v920
        %v922 = vrot.slane %v819, 7
        %v923 = vsel %vm611, %v922, %v921
        %v924 = vrot.slane %v820, 6
        %v925 = vsel %vm614, %v924, %v923
        %v926 = vrot.slane %v821, 5
        %v927 = vsel %vm617, %v926, %v925
        %v928 = vrot.slane %v822, 4
        %v929 = vsel %vm620, %v928, %v927
        %v930 = vrot.slane %v823, 3
        %v931 = vsel %vm623, %v930, %v929
        %v932 = vrot.slane %v824, 2
        %v933 = vsel %vm626, %v932, %v931
        %v934 = vpack.c.b16 %v933, %v919
        %v936 = vsel %vm643, %v934, 0
        %938 = vmatprep.subr.bf16.mxu0 0
        %939 = vmatpush1.bf16.msra.mxu0 0
        %940 = vmatprep.subr.bf16.mxu0 0
        %941 = vmatpush1.bf16.msra.mxu0 0
        %942 = vmatprep.subr.bf16.mxu0 0
        %943 = vmatpush1.bf16.msra.mxu0 0
        %944 = vmatprep.subr.bf16.mxu0 0
        %945 = vmatpush1.bf16.msra.mxu0 0
        %946 = vmatprep.subr.bf16.mxu0 0
        %947 = vmatpush1.bf16.msra.mxu0 0
        %948 = vmatprep.subr.bf16.mxu0 0
        %949 = vmatpush1.bf16.msra.mxu0 0
        %950 = vmatprep.subr.bf16.mxu0 0
        %951 = vmatpush1.bf16.msra.mxu0 %v905
        %952 = vmatprep.subr.bf16.mxu0 0
        %953 = vmatpush1.bf16.msra.mxu0 %v904
        %954 = vmatprep.subr.bf16.mxu0 0
        %955 = vmatpush2.bf16.msra.mxu0 0
        %956 = vmatprep.subr.bf16.mxu0 0
        %957 = vmatpush2.bf16.msra.mxu0 0
        %958 = vmatprep.subr.bf16.mxu0 0
        %959 = vmatpush2.bf16.msra.mxu0 0
        %960 = vmatprep.subr.bf16.mxu0 0
        %961 = vmatpush2.bf16.msra.mxu0 0
        %962 = vmatprep.subr.bf16.mxu0 0
        %963 = vmatpush2.bf16.msra.mxu0 0
        %964 = vmatprep.subr.bf16.mxu0 0
        %965 = vmatpush2.bf16.msra.mxu0 0
        %966 = vmatprep.subr.bf16.mxu0 0
        %967 = vmatpush2.bf16.msra.mxu0 0
        %968 = vmatprep.subr.bf16.mxu0 0
        %969 = vmatpush2.bf16.msra.mxu0 0
        %970 = vmatprep.mubr.bf16.mxu0 0
        %971 = vmatmul.mubr.bf16.gmra.mxu0 %v936
        %v972 = vpop.f32.mrf.mxu0
        %v973 = vadd.f32 0.0, %v972
        %v974 = vpop.f32.mrf.mxu0
        %v975 = vpop.f32.mrf.mxu0
        %v976 = vadd.f32 0.0, %v975
        %v977 = vpop.f32.mrf.mxu0
        %978 = vdwg.mxu0
        %v979 = vadd.f32 %v898, %v973
        %v980 = vadd.f32 %v899, %v976
        %v981 = vsel %vm643, %v979, 0.0
        %982 = vadd.xlane.f32.xlu0 %v981
        %v983 = vpop.xlane.xlu0 %982
        %v984 = vsel %vm643, %v980, 0.0
        %985 = vadd.xlane.f32.xlu0 %v984
        %v986 = vpop.xlane.xlu0 %985
        %v987 = vrcp.pop 32.0
        %v988 = vmul.f32 %v983, %v987
        %v989 = vmul.f32 %v986, %v987
        %v990 = vmul.f32 %v979, %v979
        %v991 = vmul.f32 %v980, %v980
        %v992 = vsel %vm643, %v990, 0.0
        %993 = vadd.xlane.f32.xlu0 %v992
        %v994 = vpop.xlane.xlu0 %993
        %v995 = vsel %vm643, %v991, 0.0
        %996 = vadd.xlane.f32.xlu0 %v995
        %v997 = vpop.xlane.xlu0 %996
        %v998 = vmul.f32 %v994, %v987
        %v999 = vmul.f32 %v997, %v987
        %v1000 = vmul.f32 %v988, %v988
        %v1001 = vmul.f32 %v989, %v989
        %v1002 = vsub.f32 %v998, %v1000
        %v1003 = vsub.f32 %v999, %v1001
        %v1004 = vsub.f32 %v979, %v988
        %v1005 = vsub.f32 %v980, %v989
        %v1006 = vmax.f32 %v1002, 0.0
        %v1007 = vmax.f32 %v1003, 0.0
        %v1008 = vadd.f32 %v1006, 1e-05
        %v1009 = vadd.f32 %v1007, 1e-05
        %v1010 = vrsqrt.pop %v1008
        %v1011 = vrsqrt.pop %v1009
        %v1012 = vmul.f32 %v1004, %v1010
        %v1013 = vmul.f32 %v1005, %v1011
        %v1014 = vld [vmem:[%s5] sm:$0x1]
        %v1016 = vlaneseq
        %v1017 = vshrl.u32 %v1016, 7
        %v1018 = vsub.s32 0, %v1017
        %v1019 = vrot.slane %v1014, %v1018
        %v1021 = vmul.f32 %v1012, %v1019
        %v1022 = vmul.f32 %v1013, %v1019
        %v1023 = vld [vmem:[%s6] sm:$0x1]
        %v1025 = vlaneseq
        %v1026 = vshrl.u32 %v1025, 7
        %v1027 = vsub.s32 0, %v1026
        %v1028 = vrot.slane %v1023, %v1027
        %v1030 = vadd.f32 %v1021, %v1028
        %v1031 = vadd.f32 %v1022, %v1028
        %v1032 = vpack.c.bf16 %v1031, %v1030
        %v1033 = vld [vmem:[%s2] sm:$0xff]
        %v1034 = vld [vmem:[%s2 + $0x8] sm:$0xff]
        %v1035 = vld [vmem:[%s2 + $0x10] sm:$0xff]
        %v1036 = vld [vmem:[%s2 + $0x18] sm:$0xff]
        %v1037 = vpack.c.bf16 %v1034, %v1033
        %v1038 = vpack.c.bf16 %v1036, %v1035
        %v1040 = vsel %vm643, %v1032, 0
        %1042 = vmatprep.subr.bf16.mxu0 0
        %1043 = vmatpush1.bf16.msra.mxu0 0
        %1044 = vmatprep.subr.bf16.mxu0 0
        %1045 = vmatpush1.bf16.msra.mxu0 0
        %1046 = vmatprep.subr.bf16.mxu0 0
        %1047 = vmatpush1.bf16.msra.mxu0 0
        %1048 = vmatprep.subr.bf16.mxu0 0
        %1049 = vmatpush1.bf16.msra.mxu0 0
        %1050 = vmatprep.subr.bf16.mxu0 0
        %1051 = vmatpush1.bf16.msra.mxu0 0
        %1052 = vmatprep.subr.bf16.mxu0 0
        %1053 = vmatpush1.bf16.msra.mxu0 0
        %1054 = vmatprep.subr.bf16.mxu0 0
        %1055 = vmatpush1.bf16.msra.mxu0 %v1038
        %1056 = vmatprep.subr.bf16.mxu0 0
        %1057 = vmatpush1.bf16.msra.mxu0 %v1037
        %1058 = vmatprep.subr.bf16.mxu0 0
        %1059 = vmatpush2.bf16.msra.mxu0 0
        %1060 = vmatprep.subr.bf16.mxu0 0
        %1061 = vmatpush2.bf16.msra.mxu0 0
        %1062 = vmatprep.subr.bf16.mxu0 0
        %1063 = vmatpush2.bf16.msra.mxu0 0
        %1064 = vmatprep.subr.bf16.mxu0 0
        %1065 = vmatpush2.bf16.msra.mxu0 0
        %1066 = vmatprep.subr.bf16.mxu0 0
        %1067 = vmatpush2.bf16.msra.mxu0 0
        %1068 = vmatprep.subr.bf16.mxu0 0
        %1069 = vmatpush2.bf16.msra.mxu0 0
        %1070 = vmatprep.subr.bf16.mxu0 0
        %1071 = vmatpush2.bf16.msra.mxu0 0
        %1072 = vmatprep.subr.bf16.mxu0 0
        %1073 = vmatpush2.bf16.msra.mxu0 0
        %1074 = vmatprep.mubr.bf16.mxu0 0
        %1075 = vmatmul.mubr.bf16.gmra.mxu0 %v1040
        %v1076 = vpop.f32.mrf.mxu0
        %v1077 = vadd.f32 0.0, %v1076
        %v1078 = vpop.f32.mrf.mxu0
        %v1079 = vpop.f32.mrf.mxu0
        %v1080 = vadd.f32 0.0, %v1079
        %v1081 = vpop.f32.mrf.mxu0
        %1082 = vdwg.mxu0
        %1083 = vst.msk [vmem:[#allocation2] sm:$0xff] %vm643, 0.0
        %1084 = vst.msk [vmem:[#allocation2 + $0x8] sm:$0xff] %vm643, 0.0
        %1085 = vst.msk [vmem:[#allocation2 + $0x10] sm:$0xff] %vm643, 0.0
        %1086 = vst.msk [vmem:[#allocation2 + $0x18] sm:$0xff] %vm643, 0.0
        %1087 = vst.msk [vmem:[#allocation2 + $0x20] sm:$0xff] %vm643, 0.0
        %1088 = vst.msk [vmem:[#allocation2 + $0x28] sm:$0xff] %vm643, 0.0
        %1089 = vst.msk [vmem:[#allocation2 + $0x30] sm:$0xff] %vm643, 0.0
        %1090 = vst.msk [vmem:[#allocation2 + $0x38] sm:$0xff] %vm643, 0.0
        %1091 = vst.msk [vmem:[#allocation2 + $0x40] sm:$0xff] %vm643, 0.0
        %1092 = vst.msk [vmem:[#allocation2 + $0x48] sm:$0xff] %vm643, 0.0
        %1093 = vst.msk [vmem:[#allocation2 + $0x50] sm:$0xff] %vm643, 0.0
        %1094 = vst.msk [vmem:[#allocation2 + $0x58] sm:$0xff] %vm643, 0.0
        %1095 = vst.msk [vmem:[#allocation2 + $0x60] sm:$0xff] %vm643, 0.0
        %1096 = vst.msk [vmem:[#allocation2 + $0x68] sm:$0xff] %vm643, 0.0
        %1097 = vst.msk [vmem:[#allocation2 + $0x70] sm:$0xff] %vm643, 0.0
        %1098 = vst.msk [vmem:[#allocation2 + $0x78] sm:$0xff] %vm643, 0.0
        %1099 = vst.msk [vmem:[#allocation3] sm:$0xff] %vm643, 0.0
        %1100 = vst.msk [vmem:[#allocation3 + $0x8] sm:$0xff] %vm643, 0.0
        %1101 = vst.msk [vmem:[#allocation3 + $0x10] sm:$0xff] %vm643, 0.0
        %1102 = vst.msk [vmem:[#allocation3 + $0x18] sm:$0xff] %vm643, 0.0
        %1103 = vst.msk [vmem:[#allocation3 + $0x20] sm:$0xff] %vm643, 0.0
        %1104 = vst.msk [vmem:[#allocation3 + $0x28] sm:$0xff] %vm643, 0.0
        %1105 = vst.msk [vmem:[#allocation3 + $0x30] sm:$0xff] %vm643, 0.0
        %1106 = vst.msk [vmem:[#allocation3 + $0x38] sm:$0xff] %vm643, 0.0
        %1107 = vst.msk [vmem:[#allocation3 + $0x40] sm:$0xff] %vm643, 0.0
        %1108 = vst.msk [vmem:[#allocation3 + $0x48] sm:$0xff] %vm643, 0.0
        %1109 = vst.msk [vmem:[#allocation3 + $0x50] sm:$0xff] %vm643, 0.0
        %1110 = vst.msk [vmem:[#allocation3 + $0x58] sm:$0xff] %vm643, 0.0
        %1111 = vst.msk [vmem:[#allocation3 + $0x60] sm:$0xff] %vm643, 0.0
        %1112 = vst.msk [vmem:[#allocation3 + $0x68] sm:$0xff] %vm643, 0.0
        %1113 = vst.msk [vmem:[#allocation3 + $0x70] sm:$0xff] %vm643, 0.0
        %1114 = vst.msk [vmem:[#allocation3 + $0x78] sm:$0xff] %vm643, 0.0
        %1115 = vst.msk [vmem:[#allocation2] sm:$0xff] %vm643, %v1077
        %1116 = vst.msk [vmem:[#allocation2 + $0x8] sm:$0xff] %vm643, %v1080
        %1119 = vrot.lane.b32.xlu0 %v1077, 96
        %v1120 = vpop.permute.xlu0 %1119
        %1121 = vrot.lane.b32.xlu0 %v1080, 96
        %v1122 = vpop.permute.xlu0 %1121
        %1125 = vst.msk [vmem:[#allocation3] sm:$0xff] %vm643, %v1120
        %1126 = vst.msk [vmem:[#allocation3 + $0x8] sm:$0xff] %vm643, %v1122
      $region60: #{tpu_custom_call.1} parent=55 // pred_fallthru
        _
      %s1127 = smul.u32 %s25, 32
      %s1128 = scalar_lea.vmem %s345, %s1127
      %v1129 = vld [vmem:[%s1128] sm:$0xff]
      %v1130 = vld [vmem:[%s1128 + $0x8] sm:$0xff]
      %v1131 = vld [vmem:[%s1128 + $0x10] sm:$0xff]
      %v1132 = vld [vmem:[%s1128 + $0x18] sm:$0xff]
      %v1133 = vpack.c.bf16 %v1130, %v1129
      %v1134 = vpack.c.bf16 %v1132, %v1131
      %v1135 = vld [vmem:[%s1] sm:$0xff]
      %v1136 = vld [vmem:[%s1 + $0x8] sm:$0xff]
      %v1137 = vld [vmem:[%s1 + $0x10] sm:$0xff]
      %v1138 = vld [vmem:[%s1 + $0x18] sm:$0xff]
      %v1139 = vpack.c.bf16 %v1136, %v1135
      %v1140 = vpack.c.bf16 %v1138, %v1137
      %vm1141 = vcmask 261120
      %v1143 = vsel %vm1141, %v1133, 0
      %v1146 = vsel %vm1141, %v1134, 0
      %1148 = vmatprep.subr.bf16.mxu0 0
      %1149 = vmatpush1.bf16.msra.mxu0 0
      %1150 = vmatprep.subr.bf16.mxu0 0
      %1151 = vmatpush1.bf16.msra.mxu0 0
      %1152 = vmatprep.subr.bf16.mxu0 0
      %1153 = vmatpush1.bf16.msra.mxu0 0
      %1154 = vmatprep.subr.bf16.mxu0 0
      %1155 = vmatpush1.bf16.msra.mxu0 0
      %1156 = vmatprep.subr.bf16.mxu0 0
      %1157 = vmatpush1.bf16.msra.mxu0 0
      %1158 = vmatprep.subr.bf16.mxu0 0
      %1159 = vmatpush1.bf16.msra.mxu0 0
      %1160 = vmatprep.subr.bf16.mxu0 0
      %1161 = vmatpush1.bf16.msra.mxu0 %v1140
      %1162 = vmatprep.subr.bf16.mxu0 0
      %1163 = vmatpush1.bf16.msra.mxu0 %v1139
      %1164 = vmatprep.subr.bf16.mxu0 0
      %1165 = vmatpush2.bf16.msra.mxu0 0
      %1166 = vmatprep.subr.bf16.mxu0 0
      %1167 = vmatpush2.bf16.msra.mxu0 0
      %1168 = vmatprep.subr.bf16.mxu0 0
      %1169 = vmatpush2.bf16.msra.mxu0 0
      %1170 = vmatprep.subr.bf16.mxu0 0
      %1171 = vmatpush2.bf16.msra.mxu0 0
      %1172 = vmatprep.subr.bf16.mxu0 0
      %1173 = vmatpush2.bf16.msra.mxu0 0
      %1174 = vmatprep.subr.bf16.mxu0 0
      %1175 = vmatpush2.bf16.msra.mxu0 0
      %1176 = vmatprep.subr.bf16.mxu0 0
      %1177 = vmatpush2.bf16.msra.mxu0 0
      %1178 = vmatprep.subr.bf16.mxu0 0
      %1179 = vmatpush2.bf16.msra.mxu0 0
      %1180 = vmatprep.mubr.bf16.mxu0 0
      %1181 = vmatmul.mubr.bf16.gmra.mxu0 %v1143
      %v1182 = vpop.f32.mrf.mxu0
      %v1183 = vadd.f32 0.0, %v1182
      %v1184 = vpop.f32.mrf.mxu0
      %v1185 = vpop.f32.mrf.mxu0
      %v1186 = vadd.f32 0.0, %v1185
      %v1187 = vpop.f32.mrf.mxu0
      %1188 = vmatprep.mubr.bf16.mxu0 0
      %1189 = vmatmul.mubr.bf16.gmra.mxu0 %v1146
      %v1190 = vpop.f32.mrf.mxu0
      %v1191 = vadd.f32 0.0, %v1190
      %v1192 = vpop.f32.mrf.mxu0
      %v1193 = vpop.f32.mrf.mxu0
      %v1194 = vadd.f32 0.0, %v1193
      %v1195 = vpop.f32.mrf.mxu0
      %1196 = vdwg.mxu0
      %v1197 = vmul.f32 %v1183, 0.35355338
      %v1198 = vmul.f32 %v1186, 0.35355338
      %v1199 = vmul.f32 %v1191, 0.35355338
      %v1200 = vmul.f32 %v1194, 0.35355338
      %v1201 = vpack.c.bf16 %v1198, %v1197
      %v1202 = vpack.c.bf16 %v1200, %v1199
      %v1203 = vld [vmem:[#allocation2] sm:$0xff]
      %v1204 = vld [vmem:[#allocation2 + $0x8] sm:$0xff]
      %v1205 = vld [vmem:[#allocation2 + $0x10] sm:$0xff]
      %v1206 = vld [vmem:[#allocation2 + $0x18] sm:$0xff]
      %v1207 = vld [vmem:[#allocation2 + $0x20] sm:$0xff]
      %v1208 = vld [vmem:[#allocation2 + $0x28] sm:$0xff]
      %v1209 = vld [vmem:[#allocation2 + $0x30] sm:$0xff]
      %v1210 = vld [vmem:[#allocation2 + $0x38] sm:$0xff]
      %v1211 = vld [vmem:[#allocation2 + $0x40] sm:$0xff]
      %v1212 = vld [vmem:[#allocation2 + $0x48] sm:$0xff]
      %v1213 = vld [vmem:[#allocation2 + $0x50] sm:$0xff]
      %v1214 = vld [vmem:[#allocation2 + $0x58] sm:$0xff]
      %v1215 = vld [vmem:[#allocation2 + $0x60] sm:$0xff]
      %v1216 = vld [vmem:[#allocation2 + $0x68] sm:$0xff]
      %v1217 = vld [vmem:[#allocation2 + $0x70] sm:$0xff]
      %v1218 = vld [vmem:[#allocation2 + $0x78] sm:$0xff]
      %v1219 = vpack.c.bf16 %v1204, %v1203
      %v1220 = vpack.c.bf16 %v1206, %v1205
      %v1221 = vpack.c.bf16 %v1208, %v1207
      %v1222 = vpack.c.bf16 %v1210, %v1209
      %v1223 = vpack.c.bf16 %v1212, %v1211
      %v1224 = vpack.c.bf16 %v1214, %v1213
      %v1225 = vpack.c.bf16 %v1216, %v1215
      %v1226 = vpack.c.bf16 %v1218, %v1217
      %v1227 = vld [vmem:[#allocation3] sm:$0xff]
      %v1228 = vld [vmem:[#allocation3 + $0x8] sm:$0xff]
      %v1229 = vld [vmem:[#allocation3 + $0x10] sm:$0xff]
      %v1230 = vld [vmem:[#allocation3 + $0x18] sm:$0xff]
      %v1231 = vld [vmem:[#allocation3 + $0x20] sm:$0xff]
      %v1232 = vld [vmem:[#allocation3 + $0x28] sm:$0xff]
      %v1233 = vld [vmem:[#allocation3 + $0x30] sm:$0xff]
      %v1234 = vld [vmem:[#allocation3 + $0x38] sm:$0xff]
      %v1235 = vld [vmem:[#allocation3 + $0x40] sm:$0xff]
      %v1236 = vld [vmem:[#allocation3 + $0x48] sm:$0xff]
      %v1237 = vld [vmem:[#allocation3 + $0x50] sm:$0xff]
      %v1238 = vld [vmem:[#allocation3 + $0x58] sm:$0xff]
      %v1239 = vld [vmem:[#allocation3 + $0x60] sm:$0xff]
      %v1240 = vld [vmem:[#allocation3 + $0x68] sm:$0xff]
      %v1241 = vld [vmem:[#allocation3 + $0x70] sm:$0xff]
      %v1242 = vld [vmem:[#allocation3 + $0x78] sm:$0xff]
      %v1243 = vpack.c.bf16 %v1228, %v1227
      %v1244 = vpack.c.bf16 %v1230, %v1229
      %v1245 = vpack.c.bf16 %v1232, %v1231
      %v1246 = vpack.c.bf16 %v1234, %v1233
      %v1247 = vpack.c.bf16 %v1236, %v1235
      %v1248 = vpack.c.bf16 %v1238, %v1237
      %v1249 = vpack.c.bf16 %v1240, %v1239
      %v1250 = vpack.c.bf16 %v1242, %v1241
      %v1251 = vld [vmem:[%s7] sm:$0xff]
      %v1252 = vld [vmem:[%s7 + $0x8] sm:$0xff]
      %v1253 = vld [vmem:[%s7 + $0x10] sm:$0xff]
      %v1254 = vld [vmem:[%s7 + $0x18] sm:$0xff]
      %v1255 = vpack.c.bf16 %v1252, %v1251
      %v1256 = vpack.c.bf16 %v1254, %v1253
      %v1257 = vlaneseq
      %v1258 = vand.u32 %v1257, 127
      %vm1259 = vcmp.lt.s32.totalorder %v1258, 16
      %v1260 = vsel %vm1259, 0.0, -1e+30
      %v1261 = vld [vmem:[%s8] sm:$0x1]
      %v1263 = vlaneseq
      %v1264 = vshrl.u32 %v1263, 7
      %v1265 = vsub.s32 0, %v1264
      %v1266 = vrot.slane %v1261, %v1265
      %v1268 = vadd.f32 %v1266, 0.0
      %vm1269 = vcmask 64512
      %v1271 = vsel %vm1269, %v1201, 0
      %v1274 = vsel %vm1269, %v1202, 0
      %v1277 = vsel %vm1269, %v1219, 0
      %v1280 = vsel %vm1269, %v1220, 0
      %v1283 = vsel %vm1269, %v1221, 0
      %v1286 = vsel %vm1269, %v1222, 0
      %v1289 = vsel %vm1269, %v1223, 0
      %v1292 = vsel %vm1269, %v1224, 0
      %v1295 = vsel %vm1269, %v1225, 0
      %v1298 = vsel %vm1269, %v1226, 0
      %1300 = vmatprep.subr.bf16.mxu0 0
      %1301 = vmatpush1.bf16.xpose.msra.mxu0 %v1298
      %1302 = vmatprep.subr.bf16.mxu0 0
      %1303 = vmatpush1.bf16.xpose.msra.mxu0 %v1295
      %1304 = vmatprep.subr.bf16.mxu0 0
      %1305 = vmatpush1.bf16.xpose.msra.mxu0 %v1292
      %1306 = vmatprep.subr.bf16.mxu0 0
      %1307 = vmatpush1.bf16.xpose.msra.mxu0 %v1289
      %1308 = vmatprep.subr.bf16.mxu0 0
      %1309 = vmatpush1.bf16.xpose.msra.mxu0 %v1286
      %1310 = vmatprep.subr.bf16.mxu0 0
      %1311 = vmatpush1.bf16.xpose.msra.mxu0 %v1283
      %1312 = vmatprep.subr.bf16.mxu0 0
      %1313 = vmatpush1.bf16.xpose.msra.mxu0 %v1280
      %1314 = vmatprep.subr.bf16.mxu0 0
      %1315 = vmatpush1.bf16.xpose.msra.mxu0 %v1277
      %1316 = vmatprep.subr.bf16.mxu0 0
      %1317 = vmatpush2.bf16.xpose.msra.mxu0 0
      %1318 = vmatprep.subr.bf16.mxu0 0
      %1319 = vmatpush2.bf16.xpose.msra.mxu0 0
      %1320 = vmatprep.subr.bf16.mxu0 0
      %1321 = vmatpush2.bf16.xpose.msra.mxu0 0
      %1322 = vmatprep.subr.bf16.mxu0 0
      %1323 = vmatpush2.bf16.xpose.msra.mxu0 0
      %1324 = vmatprep.subr.bf16.mxu0 0
      %1325 = vmatpush2.bf16.xpose.msra.mxu0 0
      %1326 = vmatprep.subr.bf16.mxu0 0
      %1327 = vmatpush2.bf16.xpose.msra.mxu0 0
      %1328 = vmatprep.subr.bf16.mxu0 0
      %1329 = vmatpush2.bf16.xpose.msra.mxu0 0
      %1330 = vmatprep.subr.bf16.mxu0 0
      %1331 = vmatpush2.bf16.xpose.msra.mxu0 0
      %1332 = vmatprep.mubr.bf16.mxu0 0
      %1333 = vmatmul.mubr.bf16.gmra.mxu0 %v1271
      %v1334 = vpop.f32.mrf.mxu0
      %v1335 = vadd.f32 %v1260, %v1334
      %v1336 = vpop.f32.mrf.mxu0
      %v1337 = vpop.f32.mrf.mxu0
      %v1338 = vadd.f32 %v1260, %v1337
      %v1339 = vpop.f32.mrf.mxu0
      %1340 = vmatprep.mubr.bf16.mxu0 0
      %1341 = vmatmul.mubr.bf16.gmra.mxu0 %v1274
      %v1342 = vpop.f32.mrf.mxu0
      %v1343 = vadd.f32 %v1260, %v1342
      %v1344 = vpop.f32.mrf.mxu0
      %v1345 = vpop.f32.mrf.mxu0
      %v1346 = vadd.f32 %v1260, %v1345
      %v1347 = vpop.f32.mrf.mxu0
      %1348 = vdwg.mxu0
      %1349 = vmax.xlane.f32.xlu0 %v1335
      %v1350 = vpop.xlane.xlu0 %1349
      %1351 = vmax.xlane.f32.xlu0 %v1338
      %v1352 = vpop.xlane.xlu0 %1351
      %1353 = vmax.xlane.f32.xlu0 %v1343
      %v1354 = vpop.xlane.xlu0 %1353
      %1355 = vmax.xlane.f32.xlu0 %v1346
      %v1356 = vpop.xlane.xlu0 %1355
      %v1357 = vsub.f32 %v1335, %v1350
      %v1358 = vsub.f32 %v1338, %v1352
      %v1359 = vsub.f32 %v1343, %v1354
      %v1360 = vsub.f32 %v1346, %v1356
      %v1361 = vmul.f32 %v1357, 1.442695
      %v1362 = vpow.pop %v1361
      %v1363 = vmul.f32 %v1358, 1.442695
      %v1364 = vpow.pop %v1363
      %v1365 = vmul.f32 %v1359, 1.442695
      %v1366 = vpow.pop %v1365
      %v1367 = vmul.f32 %v1360, 1.442695
      %v1368 = vpow.pop %v1367
      %1369 = vadd.xlane.f32.xlu0 %v1362
      %v1370 = vpop.xlane.xlu0 %1369
      %1371 = vadd.xlane.f32.xlu0 %v1364
      %v1372 = vpop.xlane.xlu0 %1371
      %1373 = vadd.xlane.f32.xlu0 %v1366
      %v1374 = vpop.xlane.xlu0 %1373
      %1375 = vadd.xlane.f32.xlu0 %v1368
      %v1376 = vpop.xlane.xlu0 %1375
      %v1377 = vrcp.pop %v1370
      %v1378 = vrcp.pop %v1372
      %v1379 = vrcp.pop %v1374
      %v1380 = vrcp.pop %v1376
      %v1381 = vmul.f32 %v1362, %v1377
      %v1382 = vmul.f32 %v1364, %v1378
      %v1383 = vmul.f32 %v1366, %v1379
      %v1384 = vmul.f32 %v1368, %v1380
      %v1385 = vpack.c.bf16 %v1382, %v1381
      %v1386 = vpack.c.bf16 %v1384, %v1383
      %1387 = vmatprep.subr.bf16.mxu0 0
      %1388 = vmatpush1.bf16.msra.mxu0 %v1250
      %1389 = vmatprep.subr.bf16.mxu0 0
      %1390 = vmatpush1.bf16.msra.mxu0 %v1249
      %1391 = vmatprep.subr.bf16.mxu0 0
      %1392 = vmatpush1.bf16.msra.mxu0 %v1248
      %1393 = vmatprep.subr.bf16.mxu0 0
      %1394 = vmatpush1.bf16.msra.mxu0 %v1247
      %1395 = vmatprep.subr.bf16.mxu0 0
      %1396 = vmatpush1.bf16.msra.mxu0 %v1246
      %1397 = vmatprep.subr.bf16.mxu0 0
      %1398 = vmatpush1.bf16.msra.mxu0 %v1245
      %1399 = vmatprep.subr.bf16.mxu0 0
      %1400 = vmatpush1.bf16.msra.mxu0 %v1244
      %1401 = vmatprep.subr.bf16.mxu0 0
      %1402 = vmatpush1.bf16.msra.mxu0 %v1243
      %1403 = vmatprep.subr.bf16.mxu0 0
      %1404 = vmatpush2.bf16.msra.mxu0 0
      %1405 = vmatprep.subr.bf16.mxu0 0
      %1406 = vmatpush2.bf16.msra.mxu0 0
      %1407 = vmatprep.subr.bf16.mxu0 0
      %1408 = vmatpush2.bf16.msra.mxu0 0
      %1409 = vmatprep.subr.bf16.mxu0 0
      %1410 = vmatpush2.bf16.msra.mxu0 0
      %1411 = vmatprep.subr.bf16.mxu0 0
      %1412 = vmatpush2.bf16.msra.mxu0 0
      %1413 = vmatprep.subr.bf16.mxu0 0
      %1414 = vmatpush2.bf16.msra.mxu0 0
      %1415 = vmatprep.subr.bf16.mxu0 0
      %1416 = vmatpush2.bf16.msra.mxu0 0
      %1417 = vmatprep.subr.bf16.mxu0 0
      %1418 = vmatpush2.bf16.msra.mxu0 0
      %1419 = vmatprep.mubr.bf16.mxu0 0
      %1420 = vmatmul.mubr.bf16.gmra.mxu0 %v1385
      %v1421 = vpop.f32.mrf.mxu0
      %v1422 = vadd.f32 0.0, %v1421
      %v1423 = vpop.f32.mrf.mxu0
      %v1424 = vpop.f32.mrf.mxu0
      %v1425 = vadd.f32 0.0, %v1424
      %v1426 = vpop.f32.mrf.mxu0
      %1427 = vmatprep.mubr.bf16.mxu0 0
      %1428 = vmatmul.mubr.bf16.gmra.mxu0 %v1386
      %v1429 = vpop.f32.mrf.mxu0
      %v1430 = vadd.f32 0.0, %v1429
      %v1431 = vpop.f32.mrf.mxu0
      %v1432 = vpop.f32.mrf.mxu0
      %v1433 = vadd.f32 0.0, %v1432
      %v1434 = vpop.f32.mrf.mxu0
      %1435 = vdwg.mxu0
      %v1436 = vpack.c.bf16 %v1425, %v1422
      %v1437 = vpack.c.bf16 %v1433, %v1430
      %v1439 = vsel %vm1269, %v1436, 0
      %v1442 = vsel %vm1269, %v1437, 0
      %vm1444 = vcmask 1043456
      %v1446 = vsel %vm1444, %v1255, 0
      %1448 = vmatprep.subr.bf16.mxu0 0
      %1449 = vmatpush1.bf16.msra.mxu0 0
      %1450 = vmatprep.subr.bf16.mxu0 0
      %1451 = vmatpush1.bf16.msra.mxu0 0
      %1452 = vmatprep.subr.bf16.mxu0 0
      %1453 = vmatpush1.bf16.msra.mxu0 0
      %1454 = vmatprep.subr.bf16.mxu0 0
      %1455 = vmatpush1.bf16.msra.mxu0 0
      %1456 = vmatprep.subr.bf16.mxu0 0
      %1457 = vmatpush1.bf16.msra.mxu0 0
      %1458 = vmatprep.subr.bf16.mxu0 0
      %1459 = vmatpush1.bf16.msra.mxu0 0
      %1460 = vmatprep.subr.bf16.mxu0 0
      %1461 = vmatpush1.bf16.msra.mxu0 0
      %1462 = vmatprep.subr.bf16.mxu0 0
      %1463 = vmatpush1.bf16.msra.mxu0 %v1446
      %1464 = vmatprep.subr.bf16.mxu0 0
      %1465 = vmatpush2.bf16.msra.mxu0 0
      %1466 = vmatprep.subr.bf16.mxu0 0
      %1467 = vmatpush2.bf16.msra.mxu0 0
      %1468 = vmatprep.subr.bf16.mxu0 0
      %1469 = vmatpush2.bf16.msra.mxu0 0
      %1470 = vmatprep.subr.bf16.mxu0 0
      %1471 = vmatpush2.bf16.msra.mxu0 0
      %1472 = vmatprep.subr.bf16.mxu0 0
      %1473 = vmatpush2.bf16.msra.mxu0 0
      %1474 = vmatprep.subr.bf16.mxu0 0
      %1475 = vmatpush2.bf16.msra.mxu0 0
      %1476 = vmatprep.subr.bf16.mxu0 0
      %1477 = vmatpush2.bf16.msra.mxu0 0
      %1478 = vmatprep.subr.bf16.mxu0 0
      %1479 = vmatpush2.bf16.msra.mxu0 0
      %1480 = vmatprep.mubr.bf16.mxu0 0
      %1481 = vmatmul.mubr.bf16.gmra.mxu0 %v1439
      %v1482 = vpop.f32.mrf.mxu0
      %v1483 = vadd.f32 0.0, %v1482
      %v1484 = vpop.f32.mrf.mxu0
      %v1485 = vpop.f32.mrf.mxu0
      %v1486 = vadd.f32 0.0, %v1485
      %v1487 = vpop.f32.mrf.mxu0
      %1488 = vmatprep.mubr.bf16.mxu0 0
      %1489 = vmatmul.mubr.bf16.gmra.mxu0 %v1442
      %v1490 = vpop.f32.mrf.mxu0
      %v1491 = vadd.f32 0.0, %v1490
      %v1492 = vpop.f32.mrf.mxu0
      %v1493 = vpop.f32.mrf.mxu0
      %v1494 = vadd.f32 0.0, %v1493
      %v1495 = vpop.f32.mrf.mxu0
      %1496 = vdwg.mxu0
      %v1497 = vadd.f32 %v1268, %v1483
      %v1498 = vadd.f32 %v1268, %v1486
      %v1499 = vadd.f32 %v1268, %v1491
      %v1500 = vadd.f32 %v1268, %v1494
      %1503 = vrot.lane.b32.xlu0 %v1201, 120
      %v1504 = vpop.permute.xlu0 %1503
      %1505 = vrot.lane.b32.xlu0 %v1202, 120
      %v1506 = vpop.permute.xlu0 %1505
      %1515 = vrot.lane.b32.xlu0 %v1219, 120
      %v1516 = vpop.permute.xlu0 %1515
      %1517 = vrot.lane.b32.xlu0 %v1220, 120
      %v1518 = vpop.permute.xlu0 %1517
      %1519 = vrot.lane.b32.xlu0 %v1221, 120
      %v1520 = vpop.permute.xlu0 %1519
      %1521 = vrot.lane.b32.xlu0 %v1222, 120
      %v1522 = vpop.permute.xlu0 %1521
      %1523 = vrot.lane.b32.xlu0 %v1223, 120
      %v1524 = vpop.permute.xlu0 %1523
      %1525 = vrot.lane.b32.xlu0 %v1224, 120
      %v1526 = vpop.permute.xlu0 %1525
      %1527 = vrot.lane.b32.xlu0 %v1225, 120
      %v1528 = vpop.permute.xlu0 %1527
      %1529 = vrot.lane.b32.xlu0 %v1226, 120
      %v1530 = vpop.permute.xlu0 %1529
      %v1532 = vsel %vm1269, %v1504, 0
      %v1535 = vsel %vm1269, %v1506, 0
      %v1538 = vsel %vm1269, %v1516, 0
      %v1541 = vsel %vm1269, %v1518, 0
      %v1544 = vsel %vm1269, %v1520, 0
      %v1547 = vsel %vm1269, %v1522, 0
      %v1550 = vsel %vm1269, %v1524, 0
      %v1553 = vsel %vm1269, %v1526, 0
      %v1556 = vsel %vm1269, %v1528, 0
      %v1559 = vsel %vm1269, %v1530, 0
      %1561 = vmatprep.subr.bf16.mxu0 0
      %1562 = vmatpush1.bf16.xpose.msra.mxu0 %v1559
      %1563 = vmatprep.subr.bf16.mxu0 0
      %1564 = vmatpush1.bf16.xpose.msra.mxu0 %v1556
      %1565 = vmatprep.subr.bf16.mxu0 0
      %1566 = vmatpush1.bf16.xpose.msra.mxu0 %v1553
      %1567 = vmatprep.subr.bf16.mxu0 0
      %1568 = vmatpush1.bf16.xpose.msra.mxu0 %v1550
      %1569 = vmatprep.subr.bf16.mxu0 0
      %1570 = vmatpush1.bf16.xpose.msra.mxu0 %v1547
      %1571 = vmatprep.subr.bf16.mxu0 0
      %1572 = vmatpush1.bf16.xpose.msra.mxu0 %v1544
      %1573 = vmatprep.subr.bf16.mxu0 0
      %1574 = vmatpush1.bf16.xpose.msra.mxu0 %v1541
      %1575 = vmatprep.subr.bf16.mxu0 0
      %1576 = vmatpush1.bf16.xpose.msra.mxu0 %v1538
      %1577 = vmatprep.subr.bf16.mxu0 0
      %1578 = vmatpush2.bf16.xpose.msra.mxu0 0
      %1579 = vmatprep.subr.bf16.mxu0 0
      %1580 = vmatpush2.bf16.xpose.msra.mxu0 0
      %1581 = vmatprep.subr.bf16.mxu0 0
      %1582 = vmatpush2.bf16.xpose.msra.mxu0 0
      %1583 = vmatprep.subr.bf16.mxu0 0
      %1584 = vmatpush2.bf16.xpose.msra.mxu0 0
      %1585 = vmatprep.subr.bf16.mxu0 0
      %1586 = vmatpush2.bf16.xpose.msra.mxu0 0
      %1587 = vmatprep.subr.bf16.mxu0 0
      %1588 = vmatpush2.bf16.xpose.msra.mxu0 0
      %1589 = vmatprep.subr.bf16.mxu0 0
      %1590 = vmatpush2.bf16.xpose.msra.mxu0 0
      %1591 = vmatprep.subr.bf16.mxu0 0
      %1592 = vmatpush2.bf16.xpose.msra.mxu0 0
      %1593 = vmatprep.mubr.bf16.mxu0 0
      %1594 = vmatmul.mubr.bf16.gmra.mxu0 %v1532
      %v1595 = vpop.f32.mrf.mxu0
      %v1596 = vadd.f32 %v1260, %v1595
      %v1597 = vpop.f32.mrf.mxu0
      %v1598 = vpop.f32.mrf.mxu0
      %v1599 = vadd.f32 %v1260, %v1598
      %v1600 = vpop.f32.mrf.mxu0
      %1601 = vmatprep.mubr.bf16.mxu0 0
      %1602 = vmatmul.mubr.bf16.gmra.mxu0 %v1535
      %v1603 = vpop.f32.mrf.mxu0
      %v1604 = vadd.f32 %v1260, %v1603
      %v1605 = vpop.f32.mrf.mxu0
      %v1606 = vpop.f32.mrf.mxu0
      %v1607 = vadd.f32 %v1260, %v1606
      %v1608 = vpop.f32.mrf.mxu0
      %1609 = vdwg.mxu0
      %1610 = vmax.xlane.f32.xlu0 %v1596
      %v1611 = vpop.xlane.xlu0 %1610
      %1612 = vmax.xlane.f32.xlu0 %v1599
      %v1613 = vpop.xlane.xlu0 %1612
      %1614 = vmax.xlane.f32.xlu0 %v1604
      %v1615 = vpop.xlane.xlu0 %1614
      %1616 = vmax.xlane.f32.xlu0 %v1607
      %v1617 = vpop.xlane.xlu0 %1616
      %v1618 = vsub.f32 %v1596, %v1611
      %v1619 = vsub.f32 %v1599, %v1613
      %v1620 = vsub.f32 %v1604, %v1615
      %v1621 = vsub.f32 %v1607, %v1617
      %v1622 = vmul.f32 %v1618, 1.442695
      %v1623 = vpow.pop %v1622
      %v1624 = vmul.f32 %v1619, 1.442695
      %v1625 = vpow.pop %v1624
      %v1626 = vmul.f32 %v1620, 1.442695
      %v1627 = vpow.pop %v1626
      %v1628 = vmul.f32 %v1621, 1.442695
      %v1629 = vpow.pop %v1628
      %1630 = vadd.xlane.f32.xlu0 %v1623
      %v1631 = vpop.xlane.xlu0 %1630
      %1632 = vadd.xlane.f32.xlu0 %v1625
      %v1633 = vpop.xlane.xlu0 %1632
      %1634 = vadd.xlane.f32.xlu0 %v1627
      %v1635 = vpop.xlane.xlu0 %1634
      %1636 = vadd.xlane.f32.xlu0 %v1629
      %v1637 = vpop.xlane.xlu0 %1636
      %v1638 = vrcp.pop %v1631
      %v1639 = vrcp.pop %v1633
      %v1640 = vrcp.pop %v1635
      %v1641 = vrcp.pop %v1637
      %v1642 = vmul.f32 %v1623, %v1638
      %v1643 = vmul.f32 %v1625, %v1639
      %v1644 = vmul.f32 %v1627, %v1640
      %v1645 = vmul.f32 %v1629, %v1641
      %v1646 = vpack.c.bf16 %v1643, %v1642
      %v1647 = vpack.c.bf16 %v1645, %v1644
      %1656 = vrot.lane.b32.xlu0 %v1243, 120
      %v1657 = vpop.permute.xlu0 %1656
      %1658 = vrot.lane.b32.xlu0 %v1244, 120
      %v1659 = vpop.permute.xlu0 %1658
      %1660 = vrot.lane.b32.xlu0 %v1245, 120
      %v1661 = vpop.permute.xlu0 %1660
      %1662 = vrot.lane.b32.xlu0 %v1246, 120
      %v1663 = vpop.permute.xlu0 %1662
      %1664 = vrot.lane.b32.xlu0 %v1247, 120
      %v1665 = vpop.permute.xlu0 %1664
      %1666 = vrot.lane.b32.xlu0 %v1248, 120
      %v1667 = vpop.permute.xlu0 %1666
      %1668 = vrot.lane.b32.xlu0 %v1249, 120
      %v1669 = vpop.permute.xlu0 %1668
      %1670 = vrot.lane.b32.xlu0 %v1250, 120
      %v1671 = vpop.permute.xlu0 %1670
      %1680 = vmatprep.subr.bf16.mxu0 0
      %1681 = vmatpush1.bf16.msra.mxu0 %v1671
      %1682 = vmatprep.subr.bf16.mxu0 0
      %1683 = vmatpush1.bf16.msra.mxu0 %v1669
      %1684 = vmatprep.subr.bf16.mxu0 0
      %1685 = vmatpush1.bf16.msra.mxu0 %v1667
      %1686 = vmatprep.subr.bf16.mxu0 0
      %1687 = vmatpush1.bf16.msra.mxu0 %v1665
      %1688 = vmatprep.subr.bf16.mxu0 0
      %1689 = vmatpush1.bf16.msra.mxu0 %v1663
      %1690 = vmatprep.subr.bf16.mxu0 0
      %1691 = vmatpush1.bf16.msra.mxu0 %v1661
      %1692 = vmatprep.subr.bf16.mxu0 0
      %1693 = vmatpush1.bf16.msra.mxu0 %v1659
      %1694 = vmatprep.subr.bf16.mxu0 0
      %1695 = vmatpush1.bf16.msra.mxu0 %v1657
      %1696 = vmatprep.subr.bf16.mxu0 0
      %1697 = vmatpush2.bf16.msra.mxu0 0
      %1698 = vmatprep.subr.bf16.mxu0 0
      %1699 = vmatpush2.bf16.msra.mxu0 0
      %1700 = vmatprep.subr.bf16.mxu0 0
      %1701 = vmatpush2.bf16.msra.mxu0 0
      %1702 = vmatprep.subr.bf16.mxu0 0
      %1703 = vmatpush2.bf16.msra.mxu0 0
      %1704 = vmatprep.subr.bf16.mxu0 0
      %1705 = vmatpush2.bf16.msra.mxu0 0
      %1706 = vmatprep.subr.bf16.mxu0 0
      %1707 = vmatpush2.bf16.msra.mxu0 0
      %1708 = vmatprep.subr.bf16.mxu0 0
      %1709 = vmatpush2.bf16.msra.mxu0 0
      %1710 = vmatprep.subr.bf16.mxu0 0
      %1711 = vmatpush2.bf16.msra.mxu0 0
      %1712 = vmatprep.mubr.bf16.mxu0 0
      %1713 = vmatmul.mubr.bf16.gmra.mxu0 %v1646
      %v1714 = vpop.f32.mrf.mxu0
      %v1715 = vadd.f32 0.0, %v1714
      %v1716 = vpop.f32.mrf.mxu0
      %v1717 = vpop.f32.mrf.mxu0
      %v1718 = vadd.f32 0.0, %v1717
      %v1719 = vpop.f32.mrf.mxu0
      %1720 = vmatprep.mubr.bf16.mxu0 0
      %1721 = vmatmul.mubr.bf16.gmra.mxu0 %v1647
      %v1722 = vpop.f32.mrf.mxu0
      %v1723 = vadd.f32 0.0, %v1722
      %v1724 = vpop.f32.mrf.mxu0
      %v1725 = vpop.f32.mrf.mxu0
      %v1726 = vadd.f32 0.0, %v1725
      %v1727 = vpop.f32.mrf.mxu0
      %1728 = vdwg.mxu0
      %v1729 = vpack.c.bf16 %v1718, %v1715
      %v1730 = vpack.c.bf16 %v1726, %v1723
      %v1732 = vrot.slane %v1255, 4
      %v1734 = vsel %vm1269, %v1729, 0
      %v1737 = vsel %vm1269, %v1730, 0
      %v1740 = vsel %vm1444, %v1732, 0
      %1742 = vmatprep.subr.bf16.mxu0 0
      %1743 = vmatpush1.bf16.msra.mxu0 0
      %1744 = vmatprep.subr.bf16.mxu0 0
      %1745 = vmatpush1.bf16.msra.mxu0 0
      %1746 = vmatprep.subr.bf16.mxu0 0
      %1747 = vmatpush1.bf16.msra.mxu0 0
      %1748 = vmatprep.subr.bf16.mxu0 0
      %1749 = vmatpush1.bf16.msra.mxu0 0
      %1750 = vmatprep.subr.bf16.mxu0 0
      %1751 = vmatpush1.bf16.msra.mxu0 0
      %1752 = vmatprep.subr.bf16.mxu0 0
      %1753 = vmatpush1.bf16.msra.mxu0 0
      %1754 = vmatprep.subr.bf16.mxu0 0
      %1755 = vmatpush1.bf16.msra.mxu0 0
      %1756 = vmatprep.subr.bf16.mxu0 0
      %1757 = vmatpush1.bf16.msra.mxu0 %v1740
      %1758 = vmatprep.subr.bf16.mxu0 0
      %1759 = vmatpush2.bf16.msra.mxu0 0
      %1760 = vmatprep.subr.bf16.mxu0 0
      %1761 = vmatpush2.bf16.msra.mxu0 0
      %1762 = vmatprep.subr.bf16.mxu0 0
      %1763 = vmatpush2.bf16.msra.mxu0 0
      %1764 = vmatprep.subr.bf16.mxu0 0
      %1765 = vmatpush2.bf16.msra.mxu0 0
      %1766 = vmatprep.subr.bf16.mxu0 0
      %1767 = vmatpush2.bf16.msra.mxu0 0
      %1768 = vmatprep.subr.bf16.mxu0 0
      %1769 = vmatpush2.bf16.msra.mxu0 0
      %1770 = vmatprep.subr.bf16.mxu0 0
      %1771 = vmatpush2.bf16.msra.mxu0 0
      %1772 = vmatprep.subr.bf16.mxu0 0
      %1773 = vmatpush2.bf16.msra.mxu0 0
      %1774 = vmatprep.mubr.bf16.mxu0 0
      %1775 = vmatmul.mubr.bf16.gmra.mxu0 %v1734
      %v1776 = vpop.f32.mrf.mxu0
      %v1777 = vadd.f32 0.0, %v1776
      %v1778 = vpop.f32.mrf.mxu0
      %v1779 = vpop.f32.mrf.mxu0
      %v1780 = vadd.f32 0.0, %v1779
      %v1781 = vpop.f32.mrf.mxu0
      %1782 = vmatprep.mubr.bf16.mxu0 0
      %1783 = vmatmul.mubr.bf16.gmra.mxu0 %v1737
      %v1784 = vpop.f32.mrf.mxu0
      %v1785 = vadd.f32 0.0, %v1784
      %v1786 = vpop.f32.mrf.mxu0
      %v1787 = vpop.f32.mrf.mxu0
      %v1788 = vadd.f32 0.0, %v1787
      %v1789 = vpop.f32.mrf.mxu0
      %1790 = vdwg.mxu0
      %v1791 = vadd.f32 %v1497, %v1777
      %v1792 = vadd.f32 %v1498, %v1780
      %v1793 = vadd.f32 %v1499, %v1785
      %v1794 = vadd.f32 %v1500, %v1788
      %1795 = vrot.lane.b32.xlu0 %v1201, 112
      %v1796 = vpop.permute.xlu0 %1795
      %1797 = vrot.lane.b32.xlu0 %v1202, 112
      %v1798 = vpop.permute.xlu0 %1797
      %1799 = vrot.lane.b32.xlu0 %v1219, 112
      %v1800 = vpop.permute.xlu0 %1799
      %1801 = vrot.lane.b32.xlu0 %v1220, 112
      %v1802 = vpop.permute.xlu0 %1801
      %1803 = vrot.lane.b32.xlu0 %v1221, 112
      %v1804 = vpop.permute.xlu0 %1803
      %1805 = vrot.lane.b32.xlu0 %v1222, 112
      %v1806 = vpop.permute.xlu0 %1805
      %1807 = vrot.lane.b32.xlu0 %v1223, 112
      %v1808 = vpop.permute.xlu0 %1807
      %1809 = vrot.lane.b32.xlu0 %v1224, 112
      %v1810 = vpop.permute.xlu0 %1809
      %1811 = vrot.lane.b32.xlu0 %v1225, 112
      %v1812 = vpop.permute.xlu0 %1811
      %1813 = vrot.lane.b32.xlu0 %v1226, 112
      %v1814 = vpop.permute.xlu0 %1813
      %v1816 = vsel %vm1269, %v1796, 0
      %v1819 = vsel %vm1269, %v1798, 0
      %v1822 = vsel %vm1269, %v1800, 0
      %v1825 = vsel %vm1269, %v1802, 0
      %v1828 = vsel %vm1269, %v1804, 0
      %v1831 = vsel %vm1269, %v1806, 0
      %v1834 = vsel %vm1269, %v1808, 0
      %v1837 = vsel %vm1269, %v1810, 0
      %v1840 = vsel %vm1269, %v1812, 0
      %v1843 = vsel %vm1269, %v1814, 0
      %1845 = vmatprep.subr.bf16.mxu0 0
      %1846 = vmatpush1.bf16.xpose.msra.mxu0 %v1843
      %1847 = vmatprep.subr.bf16.mxu0 0
      %1848 = vmatpush1.bf16.xpose.msra.mxu0 %v1840
      %1849 = vmatprep.subr.bf16.mxu0 0
      %1850 = vmatpush1.bf16.xpose.msra.mxu0 %v1837
      %1851 = vmatprep.subr.bf16.mxu0 0
      %1852 = vmatpush1.bf16.xpose.msra.mxu0 %v1834
      %1853 = vmatprep.subr.bf16.mxu0 0
      %1854 = vmatpush1.bf16.xpose.msra.mxu0 %v1831
      %1855 = vmatprep.subr.bf16.mxu0 0
      %1856 = vmatpush1.bf16.xpose.msra.mxu0 %v1828
      %1857 = vmatprep.subr.bf16.mxu0 0
      %1858 = vmatpush1.bf16.xpose.msra.mxu0 %v1825
      %1859 = vmatprep.subr.bf16.mxu0 0
      %1860 = vmatpush1.bf16.xpose.msra.mxu0 %v1822
      %1861 = vmatprep.subr.bf16.mxu0 0
      %1862 = vmatpush2.bf16.xpose.msra.mxu0 0
      %1863 = vmatprep.subr.bf16.mxu0 0
      %1864 = vmatpush2.bf16.xpose.msra.mxu0 0
      %1865 = vmatprep.subr.bf16.mxu0 0
      %1866 = vmatpush2.bf16.xpose.msra.mxu0 0
      %1867 = vmatprep.subr.bf16.mxu0 0
      %1868 = vmatpush2.bf16.xpose.msra.mxu0 0
      %1869 = vmatprep.subr.bf16.mxu0 0
      %1870 = vmatpush2.bf16.xpose.msra.mxu0 0
      %1871 = vmatprep.subr.bf16.mxu0 0
      %1872 = vmatpush2.bf16.xpose.msra.mxu0 0
      %1873 = vmatprep.subr.bf16.mxu0 0
      %1874 = vmatpush2.bf16.xpose.msra.mxu0 0
      %1875 = vmatprep.subr.bf16.mxu0 0
      %1876 = vmatpush2.bf16.xpose.msra.mxu0 0
      %1877 = vmatprep.mubr.bf16.mxu0 0
      %1878 = vmatmul.mubr.bf16.gmra.mxu0 %v1816
      %v1879 = vpop.f32.mrf.mxu0
      %v1880 = vadd.f32 %v1260, %v1879
      %v1881 = vpop.f32.mrf.mxu0
      %v1882 = vpop.f32.mrf.mxu0
      %v1883 = vadd.f32 %v1260, %v1882
      %v1884 = vpop.f32.mrf.mxu0
      %1885 = vmatprep.mubr.bf16.mxu0 0
      %1886 = vmatmul.mubr.bf16.gmra.mxu0 %v1819
      %v1887 = vpop.f32.mrf.mxu0
      %v1888 = vadd.f32 %v1260, %v1887
      %v1889 = vpop.f32.mrf.mxu0
      %v1890 = vpop.f32.mrf.mxu0
      %v1891 = vadd.f32 %v1260, %v1890
      %v1892 = vpop.f32.mrf.mxu0
      %1893 = vdwg.mxu0
      %1894 = vmax.xlane.f32.xlu0 %v1880
      %v1895 = vpop.xlane.xlu0 %1894
      %1896 = vmax.xlane.f32.xlu0 %v1883
      %v1897 = vpop.xlane.xlu0 %1896
      %1898 = vmax.xlane.f32.xlu0 %v1888
      %v1899 = vpop.xlane.xlu0 %1898
      %1900 = vmax.xlane.f32.xlu0 %v1891
      %v1901 = vpop.xlane.xlu0 %1900
      %v1902 = vsub.f32 %v1880, %v1895
      %v1903 = vsub.f32 %v1883, %v1897
      %v1904 = vsub.f32 %v1888, %v1899
      %v1905 = vsub.f32 %v1891, %v1901
      %v1906 = vmul.f32 %v1902, 1.442695
      %v1907 = vpow.pop %v1906
      %v1908 = vmul.f32 %v1903, 1.442695
      %v1909 = vpow.pop %v1908
      %v1910 = vmul.f32 %v1904, 1.442695
      %v1911 = vpow.pop %v1910
      %v1912 = vmul.f32 %v1905, 1.442695
      %v1913 = vpow.pop %v1912
      %1914 = vadd.xlane.f32.xlu0 %v1907
      %v1915 = vpop.xlane.xlu0 %1914
      %1916 = vadd.xlane.f32.xlu0 %v1909
      %v1917 = vpop.xlane.xlu0 %1916
      %1918 = vadd.xlane.f32.xlu0 %v1911
      %v1919 = vpop.xlane.xlu0 %1918
      %1920 = vadd.xlane.f32.xlu0 %v1913
      %v1921 = vpop.xlane.xlu0 %1920
      %v1922 = vrcp.pop %v1915
      %v1923 = vrcp.pop %v1917
      %v1924 = vrcp.pop %v1919
      %v1925 = vrcp.pop %v1921
      %v1926 = vmul.f32 %v1907, %v1922
      %v1927 = vmul.f32 %v1909, %v1923
      %v1928 = vmul.f32 %v1911, %v1924
      %v1929 = vmul.f32 %v1913, %v1925
      %v1930 = vpack.c.bf16 %v1927, %v1926
      %v1931 = vpack.c.bf16 %v1929, %v1928
      %1932 = vrot.lane.b32.xlu0 %v1243, 112
      %v1933 = vpop.permute.xlu0 %1932
      %1934 = vrot.lane.b32.xlu0 %v1244, 112
      %v1935 = vpop.permute.xlu0 %1934
      %1936 = vrot.lane.b32.xlu0 %v1245, 112
      %v1937 = vpop.permute.xlu0 %1936
      %1938 = vrot.lane.b32.xlu0 %v1246, 112
      %v1939 = vpop.permute.xlu0 %1938
      %1940 = vrot.lane.b32.xlu0 %v1247, 112
      %v1941 = vpop.permute.xlu0 %1940
      %1942 = vrot.lane.b32.xlu0 %v1248, 112
      %v1943 = vpop.permute.xlu0 %1942
      %1944 = vrot.lane.b32.xlu0 %v1249, 112
      %v1945 = vpop.permute.xlu0 %1944
      %1946 = vrot.lane.b32.xlu0 %v1250, 112
      %v1947 = vpop.permute.xlu0 %1946
      %1956 = vmatprep.subr.bf16.mxu0 0
      %1957 = vmatpush1.bf16.msra.mxu0 %v1947
      %1958 = vmatprep.subr.bf16.mxu0 0
      %1959 = vmatpush1.bf16.msra.mxu0 %v1945
      %1960 = vmatprep.subr.bf16.mxu0 0
      %1961 = vmatpush1.bf16.msra.mxu0 %v1943
      %1962 = vmatprep.subr.bf16.mxu0 0
      %1963 = vmatpush1.bf16.msra.mxu0 %v1941
      %1964 = vmatprep.subr.bf16.mxu0 0
      %1965 = vmatpush1.bf16.msra.mxu0 %v1939
      %1966 = vmatprep.subr.bf16.mxu0 0
      %1967 = vmatpush1.bf16.msra.mxu0 %v1937
      %1968 = vmatprep.subr.bf16.mxu0 0
      %1969 = vmatpush1.bf16.msra.mxu0 %v1935
      %1970 = vmatprep.subr.bf16.mxu0 0
      %1971 = vmatpush1.bf16.msra.mxu0 %v1933
      %1972 = vmatprep.subr.bf16.mxu0 0
      %1973 = vmatpush2.bf16.msra.mxu0 0
      %1974 = vmatprep.subr.bf16.mxu0 0
      %1975 = vmatpush2.bf16.msra.mxu0 0
      %1976 = vmatprep.subr.bf16.mxu0 0
      %1977 = vmatpush2.bf16.msra.mxu0 0
      %1978 = vmatprep.subr.bf16.mxu0 0
      %1979 = vmatpush2.bf16.msra.mxu0 0
      %1980 = vmatprep.subr.bf16.mxu0 0
      %1981 = vmatpush2.bf16.msra.mxu0 0
      %1982 = vmatprep.subr.bf16.mxu0 0
      %1983 = vmatpush2.bf16.msra.mxu0 0
      %1984 = vmatprep.subr.bf16.mxu0 0
      %1985 = vmatpush2.bf16.msra.mxu0 0
      %1986 = vmatprep.subr.bf16.mxu0 0
      %1987 = vmatpush2.bf16.msra.mxu0 0
      %1988 = vmatprep.mubr.bf16.mxu0 0
      %1989 = vmatmul.mubr.bf16.gmra.mxu0 %v1930
      %v1990 = vpop.f32.mrf.mxu0
      %v1991 = vadd.f32 0.0, %v1990
      %v1992 = vpop.f32.mrf.mxu0
      %v1993 = vpop.f32.mrf.mxu0
      %v1994 = vadd.f32 0.0, %v1993
      %v1995 = vpop.f32.mrf.mxu0
      %1996 = vmatprep.mubr.bf16.mxu0 0
      %1997 = vmatmul.mubr.bf16.gmra.mxu0 %v1931
      %v1998 = vpop.f32.mrf.mxu0
      %v1999 = vadd.f32 0.0, %v1998
      %v2000 = vpop.f32.mrf.mxu0
      %v2001 = vpop.f32.mrf.mxu0
      %v2002 = vadd.f32 0.0, %v2001
      %v2003 = vpop.f32.mrf.mxu0
      %2004 = vdwg.mxu0
      %v2005 = vpack.c.bf16 %v1994, %v1991
      %v2006 = vpack.c.bf16 %v2002, %v1999
      %v2008 = vsel %vm1269, %v2005, 0
      %v2011 = vsel %vm1269, %v2006, 0
      %v2014 = vsel %vm1444, %v1256, 0
      %2016 = vmatprep.subr.bf16.mxu0 0
      %2017 = vmatpush1.bf16.msra.mxu0 0
      %2018 = vmatprep.subr.bf16.mxu0 0
      %2019 = vmatpush1.bf16.msra.mxu0 0
      %2020 = vmatprep.subr.bf16.mxu0 0
      %2021 = vmatpush1.bf16.msra.mxu0 0
      %2022 = vmatprep.subr.bf16.mxu0 0
      %2023 = vmatpush1.bf16.msra.mxu0 0
      %2024 = vmatprep.subr.bf16.mxu0 0
      %2025 = vmatpush1.bf16.msra.mxu0 0
      %2026 = vmatprep.subr.bf16.mxu0 0
      %2027 = vmatpush1.bf16.msra.mxu0 0
      %2028 = vmatprep.subr.bf16.mxu0 0
      %2029 = vmatpush1.bf16.msra.mxu0 0
      %2030 = vmatprep.subr.bf16.mxu0 0
      %2031 = vmatpush1.bf16.msra.mxu0 %v2014
      %2032 = vmatprep.subr.bf16.mxu0 0
      %2033 = vmatpush2.bf16.msra.mxu0 0
      %2034 = vmatprep.subr.bf16.mxu0 0
      %2035 = vmatpush2.bf16.msra.mxu0 0
      %2036 = vmatprep.subr.bf16.mxu0 0
      %2037 = vmatpush2.bf16.msra.mxu0 0
      %2038 = vmatprep.subr.bf16.mxu0 0
      %2039 = vmatpush2.bf16.msra.mxu0 0
      %2040 = vmatprep.subr.bf16.mxu0 0
      %2041 = vmatpush2.bf16.msra.mxu0 0
      %2042 = vmatprep.subr.bf16.mxu0 0
      %2043 = vmatpush2.bf16.msra.mxu0 0
      %2044 = vmatprep.subr.bf16.mxu0 0
      %2045 = vmatpush2.bf16.msra.mxu0 0
      %2046 = vmatprep.subr.bf16.mxu0 0
      %2047 = vmatpush2.bf16.msra.mxu0 0
      %2048 = vmatprep.mubr.bf16.mxu0 0
      %2049 = vmatmul.mubr.bf16.gmra.mxu0 %v2008
      %v2050 = vpop.f32.mrf.mxu0
      %v2051 = vadd.f32 0.0, %v2050
      %v2052 = vpop.f32.mrf.mxu0
      %v2053 = vpop.f32.mrf.mxu0
      %v2054 = vadd.f32 0.0, %v2053
      %v2055 = vpop.f32.mrf.mxu0
      %2056 = vmatprep.mubr.bf16.mxu0 0
      %2057 = vmatmul.mubr.bf16.gmra.mxu0 %v2011
      %v2058 = vpop.f32.mrf.mxu0
      %v2059 = vadd.f32 0.0, %v2058
      %v2060 = vpop.f32.mrf.mxu0
      %v2061 = vpop.f32.mrf.mxu0
      %v2062 = vadd.f32 0.0, %v2061
      %v2063 = vpop.f32.mrf.mxu0
      %2064 = vdwg.mxu0
      %v2065 = vadd.f32 %v1791, %v2051
      %v2066 = vadd.f32 %v1792, %v2054
      %v2067 = vadd.f32 %v1793, %v2059
      %v2068 = vadd.f32 %v1794, %v2062
      %2069 = vrot.lane.b32.xlu0 %v1201, 104
      %v2070 = vpop.permute.xlu0 %2069
      %2071 = vrot.lane.b32.xlu0 %v1202, 104
      %v2072 = vpop.permute.xlu0 %2071
      %2073 = vrot.lane.b32.xlu0 %v1219, 104
      %v2074 = vpop.permute.xlu0 %2073
      %2075 = vrot.lane.b32.xlu0 %v1220, 104
      %v2076 = vpop.permute.xlu0 %2075
      %2077 = vrot.lane.b32.xlu0 %v1221, 104
      %v2078 = vpop.permute.xlu0 %2077
      %2079 = vrot.lane.b32.xlu0 %v1222, 104
      %v2080 = vpop.permute.xlu0 %2079
      %2081 = vrot.lane.b32.xlu0 %v1223, 104
      %v2082 = vpop.permute.xlu0 %2081
      %2083 = vrot.lane.b32.xlu0 %v1224, 104
      %v2084 = vpop.permute.xlu0 %2083
      %2085 = vrot.lane.b32.xlu0 %v1225, 104
      %v2086 = vpop.permute.xlu0 %2085
      %2087 = vrot.lane.b32.xlu0 %v1226, 104
      %v2088 = vpop.permute.xlu0 %2087
      %v2090 = vsel %vm1269, %v2070, 0
      %v2093 = vsel %vm1269, %v2072, 0
      %v2096 = vsel %vm1269, %v2074, 0
      %v2099 = vsel %vm1269, %v2076, 0
      %v2102 = vsel %vm1269, %v2078, 0
      %v2105 = vsel %vm1269, %v2080, 0
      %v2108 = vsel %vm1269, %v2082, 0
      %v2111 = vsel %vm1269, %v2084, 0
      %v2114 = vsel %vm1269, %v2086, 0
      %v2117 = vsel %vm1269, %v2088, 0
      %2119 = vmatprep.subr.bf16.mxu0 0
      %2120 = vmatpush1.bf16.xpose.msra.mxu0 %v2117
      %2121 = vmatprep.subr.bf16.mxu0 0
      %2122 = vmatpush1.bf16.xpose.msra.mxu0 %v2114
      %2123 = vmatprep.subr.bf16.mxu0 0
      %2124 = vmatpush1.bf16.xpose.msra.mxu0 %v2111
      %2125 = vmatprep.subr.bf16.mxu0 0
      %2126 = vmatpush1.bf16.xpose.msra.mxu0 %v2108
      %2127 = vmatprep.subr.bf16.mxu0 0
      %2128 = vmatpush1.bf16.xpose.msra.mxu0 %v2105
      %2129 = vmatprep.subr.bf16.mxu0 0
      %2130 = vmatpush1.bf16.xpose.msra.mxu0 %v2102
      %2131 = vmatprep.subr.bf16.mxu0 0
      %2132 = vmatpush1.bf16.xpose.msra.mxu0 %v2099
      %2133 = vmatprep.subr.bf16.mxu0 0
      %2134 = vmatpush1.bf16.xpose.msra.mxu0 %v2096
      %2135 = vmatprep.subr.bf16.mxu0 0
      %2136 = vmatpush2.bf16.xpose.msra.mxu0 0
      %2137 = vmatprep.subr.bf16.mxu0 0
      %2138 = vmatpush2.bf16.xpose.msra.mxu0 0
      %2139 = vmatprep.subr.bf16.mxu0 0
      %2140 = vmatpush2.bf16.xpose.msra.mxu0 0
      %2141 = vmatprep.subr.bf16.mxu0 0
      %2142 = vmatpush2.bf16.xpose.msra.mxu0 0
      %2143 = vmatprep.subr.bf16.mxu0 0
      %2144 = vmatpush2.bf16.xpose.msra.mxu0 0
      %2145 = vmatprep.subr.bf16.mxu0 0
      %2146 = vmatpush2.bf16.xpose.msra.mxu0 0
      %2147 = vmatprep.subr.bf16.mxu0 0
      %2148 = vmatpush2.bf16.xpose.msra.mxu0 0
      %2149 = vmatprep.subr.bf16.mxu0 0
      %2150 = vmatpush2.bf16.xpose.msra.mxu0 0
      %2151 = vmatprep.mubr.bf16.mxu0 0
      %2152 = vmatmul.mubr.bf16.gmra.mxu0 %v2090
      %v2153 = vpop.f32.mrf.mxu0
      %v2154 = vadd.f32 %v1260, %v2153
      %v2155 = vpop.f32.mrf.mxu0
      %v2156 = vpop.f32.mrf.mxu0
      %v2157 = vadd.f32 %v1260, %v2156
      %v2158 = vpop.f32.mrf.mxu0
      %2159 = vmatprep.mubr.bf16.mxu0 0
      %2160 = vmatmul.mubr.bf16.gmra.mxu0 %v2093
      %v2161 = vpop.f32.mrf.mxu0
      %v2162 = vadd.f32 %v1260, %v2161
      %v2163 = vpop.f32.mrf.mxu0
      %v2164 = vpop.f32.mrf.mxu0
      %v2165 = vadd.f32 %v1260, %v2164
      %v2166 = vpop.f32.mrf.mxu0
      %2167 = vdwg.mxu0
      %2168 = vmax.xlane.f32.xlu0 %v2154
      %v2169 = vpop.xlane.xlu0 %2168
      %2170 = vmax.xlane.f32.xlu0 %v2157
      %v2171 = vpop.xlane.xlu0 %2170
      %2172 = vmax.xlane.f32.xlu0 %v2162
      %v2173 = vpop.xlane.xlu0 %2172
      %2174 = vmax.xlane.f32.xlu0 %v2165
      %v2175 = vpop.xlane.xlu0 %2174
      %v2176 = vsub.f32 %v2154, %v2169
      %v2177 = vsub.f32 %v2157, %v2171
      %v2178 = vsub.f32 %v2162, %v2173
      %v2179 = vsub.f32 %v2165, %v2175
      %v2180 = vmul.f32 %v2176, 1.442695
      %v2181 = vpow.pop %v2180
      %v2182 = vmul.f32 %v2177, 1.442695
      %v2183 = vpow.pop %v2182
      %v2184 = vmul.f32 %v2178, 1.442695
      %v2185 = vpow.pop %v2184
      %v2186 = vmul.f32 %v2179, 1.442695
      %v2187 = vpow.pop %v2186
      %2188 = vadd.xlane.f32.xlu0 %v2181
      %v2189 = vpop.xlane.xlu0 %2188
      %2190 = vadd.xlane.f32.xlu0 %v2183
      %v2191 = vpop.xlane.xlu0 %2190
      %2192 = vadd.xlane.f32.xlu0 %v2185
      %v2193 = vpop.xlane.xlu0 %2192
      %2194 = vadd.xlane.f32.xlu0 %v2187
      %v2195 = vpop.xlane.xlu0 %2194
      %v2196 = vrcp.pop %v2189
      %v2197 = vrcp.pop %v2191
      %v2198 = vrcp.pop %v2193
      %v2199 = vrcp.pop %v2195
      %v2200 = vmul.f32 %v2181, %v2196
      %v2201 = vmul.f32 %v2183, %v2197
      %v2202 = vmul.f32 %v2185, %v2198
      %v2203 = vmul.f32 %v2187, %v2199
      %v2204 = vpack.c.bf16 %v2201, %v2200
      %v2205 = vpack.c.bf16 %v2203, %v2202
      %2206 = vrot.lane.b32.xlu0 %v1243, 104
      %v2207 = vpop.permute.xlu0 %2206
      %2208 = vrot.lane.b32.xlu0 %v1244, 104
      %v2209 = vpop.permute.xlu0 %2208
      %2210 = vrot.lane.b32.xlu0 %v1245, 104
      %v2211 = vpop.permute.xlu0 %2210
      %2212 = vrot.lane.b32.xlu0 %v1246, 104
      %v2213 = vpop.permute.xlu0 %2212
      %2214 = vrot.lane.b32.xlu0 %v1247, 104
      %v2215 = vpop.permute.xlu0 %2214
      %2216 = vrot.lane.b32.xlu0 %v1248, 104
      %v2217 = vpop.permute.xlu0 %2216
      %2218 = vrot.lane.b32.xlu0 %v1249, 104
      %v2219 = vpop.permute.xlu0 %2218
      %2220 = vrot.lane.b32.xlu0 %v1250, 104
      %v2221 = vpop.permute.xlu0 %2220
      %2230 = vmatprep.subr.bf16.mxu0 0
      %2231 = vmatpush1.bf16.msra.mxu0 %v2221
      %2232 = vmatprep.subr.bf16.mxu0 0
      %2233 = vmatpush1.bf16.msra.mxu0 %v2219
      %2234 = vmatprep.subr.bf16.mxu0 0
      %2235 = vmatpush1.bf16.msra.mxu0 %v2217
      %2236 = vmatprep.subr.bf16.mxu0 0
      %2237 = vmatpush1.bf16.msra.mxu0 %v2215
      %2238 = vmatprep.subr.bf16.mxu0 0
      %2239 = vmatpush1.bf16.msra.mxu0 %v2213
      %2240 = vmatprep.subr.bf16.mxu0 0
      %2241 = vmatpush1.bf16.msra.mxu0 %v2211
      %2242 = vmatprep.subr.bf16.mxu0 0
      %2243 = vmatpush1.bf16.msra.mxu0 %v2209
      %2244 = vmatprep.subr.bf16.mxu0 0
      %2245 = vmatpush1.bf16.msra.mxu0 %v2207
      %2246 = vmatprep.subr.bf16.mxu0 0
      %2247 = vmatpush2.bf16.msra.mxu0 0
      %2248 = vmatprep.subr.bf16.mxu0 0
      %2249 = vmatpush2.bf16.msra.mxu0 0
      %2250 = vmatprep.subr.bf16.mxu0 0
      %2251 = vmatpush2.bf16.msra.mxu0 0
      %2252 = vmatprep.subr.bf16.mxu0 0
      %2253 = vmatpush2.bf16.msra.mxu0 0
      %2254 = vmatprep.subr.bf16.mxu0 0
      %2255 = vmatpush2.bf16.msra.mxu0 0
      %2256 = vmatprep.subr.bf16.mxu0 0
      %2257 = vmatpush2.bf16.msra.mxu0 0
      %2258 = vmatprep.subr.bf16.mxu0 0
      %2259 = vmatpush2.bf16.msra.mxu0 0
      %2260 = vmatprep.subr.bf16.mxu0 0
      %2261 = vmatpush2.bf16.msra.mxu0 0
      %2262 = vmatprep.mubr.bf16.mxu0 0
      %2263 = vmatmul.mubr.bf16.gmra.mxu0 %v2204
      %v2264 = vpop.f32.mrf.mxu0
      %v2265 = vadd.f32 0.0, %v2264
      %v2266 = vpop.f32.mrf.mxu0
      %v2267 = vpop.f32.mrf.mxu0
      %v2268 = vadd.f32 0.0, %v2267
      %v2269 = vpop.f32.mrf.mxu0
      %2270 = vmatprep.mubr.bf16.mxu0 0
      %2271 = vmatmul.mubr.bf16.gmra.mxu0 %v2205
      %v2272 = vpop.f32.mrf.mxu0
      %v2273 = vadd.f32 0.0, %v2272
      %v2274 = vpop.f32.mrf.mxu0
      %v2275 = vpop.f32.mrf.mxu0
      %v2276 = vadd.f32 0.0, %v2275
      %v2277 = vpop.f32.mrf.mxu0
      %2278 = vdwg.mxu0
      %v2279 = vpack.c.bf16 %v2268, %v2265
      %v2280 = vpack.c.bf16 %v2276, %v2273
      %v2282 = vrot.slane %v1256, 4
      %v2284 = vsel %vm1269, %v2279, 0
      %v2287 = vsel %vm1269, %v2280, 0
      %v2290 = vsel %vm1444, %v2282, 0
      %2292 = vmatprep.subr.bf16.mxu0 0
      %2293 = vmatpush1.bf16.msra.mxu0 0
      %2294 = vmatprep.subr.bf16.mxu0 0
      %2295 = vmatpush1.bf16.msra.mxu0 0
      %2296 = vmatprep.subr.bf16.mxu0 0
      %2297 = vmatpush1.bf16.msra.mxu0 0
      %2298 = vmatprep.subr.bf16.mxu0 0
      %2299 = vmatpush1.bf16.msra.mxu0 0
      %2300 = vmatprep.subr.bf16.mxu0 0
      %2301 = vmatpush1.bf16.msra.mxu0 0
      %2302 = vmatprep.subr.bf16.mxu0 0
      %2303 = vmatpush1.bf16.msra.mxu0 0
      %2304 = vmatprep.subr.bf16.mxu0 0
      %2305 = vmatpush1.bf16.msra.mxu0 0
      %2306 = vmatprep.subr.bf16.mxu0 0
      %2307 = vmatpush1.bf16.msra.mxu0 %v2290
      %2308 = vmatprep.subr.bf16.mxu0 0
      %2309 = vmatpush2.bf16.msra.mxu0 0
      %2310 = vmatprep.subr.bf16.mxu0 0
      %2311 = vmatpush2.bf16.msra.mxu0 0
      %2312 = vmatprep.subr.bf16.mxu0 0
      %2313 = vmatpush2.bf16.msra.mxu0 0
      %2314 = vmatprep.subr.bf16.mxu0 0
      %2315 = vmatpush2.bf16.msra.mxu0 0
      %2316 = vmatprep.subr.bf16.mxu0 0
      %2317 = vmatpush2.bf16.msra.mxu0 0
      %2318 = vmatprep.subr.bf16.mxu0 0
      %2319 = vmatpush2.bf16.msra.mxu0 0
      %2320 = vmatprep.subr.bf16.mxu0 0
      %2321 = vmatpush2.bf16.msra.mxu0 0
      %2322 = vmatprep.subr.bf16.mxu0 0
      %2323 = vmatpush2.bf16.msra.mxu0 0
      %2324 = vmatprep.mubr.bf16.mxu0 0
      %2325 = vmatmul.mubr.bf16.gmra.mxu0 %v2284
      %v2326 = vpop.f32.mrf.mxu0
      %v2327 = vadd.f32 0.0, %v2326
      %v2328 = vpop.f32.mrf.mxu0
      %v2329 = vpop.f32.mrf.mxu0
      %v2330 = vadd.f32 0.0, %v2329
      %v2331 = vpop.f32.mrf.mxu0
      %2332 = vmatprep.mubr.bf16.mxu0 0
      %2333 = vmatmul.mubr.bf16.gmra.mxu0 %v2287
      %v2334 = vpop.f32.mrf.mxu0
      %v2335 = vadd.f32 0.0, %v2334
      %v2336 = vpop.f32.mrf.mxu0
      %v2337 = vpop.f32.mrf.mxu0
      %v2338 = vadd.f32 0.0, %v2337
      %v2339 = vpop.f32.mrf.mxu0
      %2340 = vdwg.mxu0
      %v2341 = vadd.f32 %v2065, %v2327
      %v2342 = vadd.f32 %v2066, %v2330
      %v2343 = vadd.f32 %v2067, %v2335
      %v2344 = vadd.f32 %v2068, %v2338
      %2345 = vst.msk [vmem:[%s354] sm:$0xff] %vm1141, %v2341
      %2346 = vst.msk [vmem:[%s354 + $0x8] sm:$0xff] %vm1141, %v2342
      %2347 = vst.msk [vmem:[%s354 + $0x10] sm:$0xff] %vm1141, %v2343
      %2348 = vst.msk [vmem:[%s354 + $0x18] sm:$0xff] %vm1141, %v2344
      %s2349 = smul.u32 4, %s25
      %p2350 = scmp.lt.s32.totalorder %s24, 1
      %s2351 = scalar_select %p2350, %s24, 1
      %p2352 = scmp.lt.s32.totalorder %s2349, 7
      %s2353 = scalar_select %p2352, %s2349, 7
      %s2354 = smul.addr %s2351, 8
      %s2355 = sadd.s32 %s2353, %s2354
      %s2356 = smul.addr %s2355, 8
      %s2357 = scalar_lea.vmem %s9, %s2356
      // Predicated region
      $region61: #{tpu_custom_call.1} parent=55 // pred_check
        %p2358 = pneg %p246
      $region62: #{tpu_custom_call.1} parent=55 // pred_check_branch
        %2360 = sbr.rel (%p2358) target = $region64
      $region63: #{tpu_custom_call.1} parent=55 // pred_region
        %s2361 = smul.u32 4, %s25
      $region64: #{tpu_custom_call.1} parent=55 // pred_fallthru
        _
    $region56: #{tpu_custom_call.1} parent=5 // pred_fallthru
      _
    %p2362 = scmp.le.s32.totalorder 2, %s15
    // Predicated region
    $region65: #{tpu_custom_call.1} parent=5 // pred_check
      %p2363 = pneg %p2362
    $region66: #{tpu_custom_call.1} parent=5 // pred_check_branch
      %2365 = sbr.rel (%p2363) target = $region68
    $region67: #{tpu_custom_call.1} parent=5 // pred_region
      %s2366 = ssub.s32 %s15, 2
      // Predicated region
      $region69: #{tpu_custom_call.1} parent=67 // pred_check
        %p2367 = pneg %p252
      $region70: #{tpu_custom_call.1} parent=67 // pred_check_branch
        %2369 = sbr.rel (%p2367) target = $region72
      $region71: #{tpu_custom_call.1} parent=67 // pred_region
        %s2370 = smul.u32 4, %s27
        %p2371 = scmp.lt.s32.totalorder %s26, 1
        %s2372 = scalar_select %p2371, %s26, 1
        %p2373 = scmp.lt.s32.totalorder %s2370, 7
        %s2374 = scalar_select %p2373, %s2370, 7
        %s2375 = smul.addr %s2372, 8
        %s2376 = sadd.s32 %s2374, %s2375
        %s2377 = smul.addr %s2376, 8
        %s2378 = scalar_lea.vmem %s9, %s2377
      $region72: #{tpu_custom_call.1} parent=67 // pred_fallthru
        _
    $region68: #{tpu_custom_call.1} parent=5 // pred_fallthru
      _
  $region6: #{tpu_custom_call.1} parent=0 // loop_footer
    %s19 = sadd.s32 1, %s15
  $region7: #{tpu_custom_call.1} parent=0 // loop_footer_branch
    %14 = sbr.rel target = $region3
  $region8: #{tpu_custom_call.1} parent=0 // loop_exit
    _

</llo_original>
